<compile_context>
chip_gen: v7x
topology: tpu7x:2x2x1
jax: 0.10.0
libtpu: 0.0.40
codegen_flags: <defaults>
</compile_context>

<pallas_src>
import numpy as np

import jax
import jax.numpy as jnp
from jax.experimental import pallas as pl
from jax.experimental.pallas import tpu as pltpu


_LANES = 512          # lane width of the packed weight/structure buffer
_N_BIAS_ROWS = 6      # rows of the packed f32 bias buffer


def _pad16(n):
    return ((n + 15) // 16) * 16    # bf16 sublane-tile alignment


def _layout(B):
    """Row-offset table for the single packed bf16 weight/structure buffer."""
    entries = [
        # name, rows, cols (cols = width sliced inside the kernel)
        ("w1",  3 * 16 * 1,  16 * 16),      # conv1 (1->16, 16x16), kh-stacked
        ("eo1", 2 * B * 8,   B * 16),       # pool1 row-select [even; odd]
        ("tt1", 16 * 16,     2 * 8 * 16),   # pool1 lane-select [even | odd]
        ("w2",  3 * 8 * 16,  8 * 32),       # conv2 (16->32, 8x8)
        ("eo2", 2 * B * 4,   B * 8),        # pool2 row-select
        ("tt2", 8 * 32,      2 * 4 * 32),   # pool2 lane-select
        ("w3",  3 * 4 * 32,  4 * 64),       # middle conv (32->64, 4x4)
        ("wt1", 4 * 64,      2 * 8 * 32),   # ConvT1 (64->32), both H-taps
        ("pe1", B * 8,       2 * B * 4),    # ConvT1 row interleave [even|odd]
        ("wt2", 8 * 32,      2 * 16 * 16),  # ConvT2 (32->16), both H-taps
        ("pe2", B * 17,      2 * B * 8),    # ConvT2 interleave + out_padding
        ("wl",  16 * 16,     128),          # 1x1 conv, lane-padded to 128
    ]
    layout, off = {}, 0
    for name, r, c in entries:
        layout[name] = (off, r, c)
        off += _pad16(r)
    return layout, off


# ----------------------------------------------------------------------------
# The fused Pallas kernel (built around a static layout table).
# ----------------------------------------------------------------------------
def _build_kernel(layout):
    bf16 = jnp.bfloat16

    def dotf(a, b):
        # bf16 x bf16 on the MXU, f32 accumulation.
        return jnp.dot(a.astype(bf16), b.astype(bf16),
                       preferred_element_type=jnp.float32)

    def kernel(x_ref, w_ref, b_ref, o_ref):
        def cut(name):                       # static slice of the packed buffer
            off, r, c = layout[name]
            return w_ref[off:off + r, :c]

        def bias(i, c=256):
            return b_ref[i:i + 1, :c]        # (1, c) row, broadcasts over rows

        def conv3x3_relu(x, wname, bidx, H):
            # Row shifts for kh=0 / kh=2: roll + per-image boundary mask
            # (replaces the old (B*H)^2 shift-matrix GEMMs).
            h = jax.lax.broadcasted_iota(jnp.int32, x.shape, 0) % H
            up = jnp.where(h == 0,     0.0, jnp.roll(x,  1, axis=0))  # row h-1
            dn = jnp.where(h == H - 1, 0.0, jnp.roll(x, -1, axis=0))  # row h+1
            xcat = jnp.concatenate([up, x, dn], axis=-1)  # (B*H, 3*W*Cin)
            y = dotf(xcat, cut(wname)) + bias(bidx)       # ONE MXU GEMM
            return jnp.maximum(y, 0.0)

        def maxpool2x2(x, eoname, ttname):
            y = dotf(cut(eoname), x)                  # [even rows ; odd rows]
            hr = y.shape[0] // 2
            h = jnp.maximum(y[:hr], y[hr:])           # max over H pairs
            z = dotf(h, cut(ttname))                  # [even cols | odd cols]
            hl = z.shape[1] // 2
            return jnp.maximum(z[:, :hl], z[:, hl:])  # max over W pairs

        def convT2x2_relu(x, wtname, pename, bidx):
            z = dotf(x, cut(wtname))                  # [even-row | odd-row] taps
            n2 = z.shape[1] // 2
            stacked = jnp.concatenate([z[:, :n2], z[:, n2:]], axis=0)
            y = dotf(cut(pename), stacked) + bias(bidx)   # row interleave GEMM
            return jnp.maximum(y, 0.0)                    # out_padding row: bias only

        x = x_ref[...]                            # (B*16, 16)     lanes = w
        x = conv3x3_relu(x, "w1", 0, 16)          # (B*16, 256)    16 ch
        x = maxpool2x2(x, "eo1", "tt1")           # (B*8,  128)
        x = conv3x3_relu(x, "w2", 1, 8)           # (B*8,  256)    32 ch
        x = maxpool2x2(x, "eo2", "tt2")           # (B*4,  128)
        x = conv3x3_relu(x, "w3", 2, 4)           # (B*4,  256)    64 ch
        x = convT2x2_relu(x, "wt1", "pe1", 3)     # (B*8,  256)    32 ch
        x = convT2x2_relu(x, "wt2", "pe2", 4)     # (B*17, 256)    16 ch
        z = dotf(x, cut("wl")) + bias(5, 128)     # (B*17, 128)    lane-dense
        o_ref[...] = 1.0 / (1.0 + jnp.exp(-z))    # exact sigmoid

    return kernel


# ----------------------------------------------------------------------------
# Static 0/1 structure matrices (numpy, built once at pack time).
# ----------------------------------------------------------------------------
def _band_mat(W, kw):
    """(W_in, W_out) 0/1 band: w_in == w_out + kw - 1 (padding=1 conv)."""
    m = np.zeros((W, W), np.float32)
    for wo in range(W):
        wi = wo + kw - 1
        if 0 <= wi < W:
            m[wi, wo] = 1.0
    return m


def _pool_row_mats(B, H):
    """(2*B*H/2, B*H): rows [even-row select ; odd-row select] (per image)."""
    Ho = H // 2
    eo = np.zeros((2, B * Ho, B * H), np.float32)
    for b in range(B):
        for i in range(Ho):
            eo[0, b * Ho + i, b * H + 2 * i] = 1.0
            eo[1, b * Ho + i, b * H + 2 * i + 1] = 1.0
    return np.concatenate([eo[0], eo[1]], axis=0)


def _pool_lane_mats(W, C):
    """(W*C, 2*(W/2)*C): lanes [even-w select | odd-w select]."""
    Wo = W // 2
    sel = np.zeros((2, W, Wo), np.float32)
    sel[0, 2 * np.arange(Wo), np.arange(Wo)] = 1.0
    sel[1, 2 * np.arange(Wo) + 1, np.arange(Wo)] = 1.0
    eye = np.eye(C, dtype=np.float32)
    return np.concatenate([np.kron(sel[0], eye), np.kron(sel[1], eye)], axis=1)


def _interleave_mats(B, Hin, Hout):
    """(B*Hout, 2*B*Hin): [even-row scatter | odd-row scatter].
    Rows >= 2*Hin within an image (output_padding) receive nothing."""
    pe = np.zeros((2, B * Hout, B * Hin), np.float32)
    for b in range(B):
        for h in range(Hin):
            pe[0, b * Hout + 2 * h, b * Hin + h] = 1.0
            pe[1, b * Hout + 2 * h + 1, b * Hin + h] = 1.0
    return np.concatenate([pe[0], pe[1]], axis=1)


# ----------------------------------------------------------------------------
# Weight packing: torch-layout weights -> banded / block GEMM matrices.
# ----------------------------------------------------------------------------
def _pack_conv3(wt, W):
    """Conv2d weight (Cout, Cin, 3, 3) -> (3*W*Cin, W*Cout), kh blocks stacked
    along rows to match the lane-concatenated [x(h-1), x(h), x(h+1)] operand."""
    blocks = []
    for kh in range(3):
        m = None
        for kw in range(3):
            term = jnp.kron(jnp.asarray(_band_mat(W, kw)),
                            jnp.transpose(wt[:, :, kh, kw]))   # (Cin, Cout)
            m = term if m is None else m + term
        blocks.append(m)
    return jnp.concatenate(blocks, axis=0)


def _pack_convT(wt, W):
    """ConvTranspose2d weight (Cin, Cout, 2, 2) -> (W*Cin, 2*2W*Cout):
    lane blocks [even output row | odd output row], W already 2x-upsampled."""
    mats = []
    for di in range(2):
        m = None
        for dj in range(2):
            ind = np.zeros((W, 2 * W), np.float32)
            ind[np.arange(W), 2 * np.arange(W) + dj] = 1.0
            term = jnp.kron(jnp.asarray(ind), wt[:, :, di, dj])  # (Cin, Cout)
            m = term if m is None else m + term
        mats.append(m)
    return jnp.concatenate(mats, axis=-1)


def pack_params(params, batch):
    """One-time packing: everything into ONE bf16 buffer + ONE f32 bias buffer."""
    B = batch
    layout, total = _layout(B)
    mats = {
        "w1":  _pack_conv3(params["enc1_w"], 16),
        "eo1": jnp.asarray(_pool_row_mats(B, 16)),
        "tt1": jnp.asarray(_pool_lane_mats(16, 16)),
        "w2":  _pack_conv3(params["enc2_w"], 8),
        "eo2": jnp.asarray(_pool_row_mats(B, 8)),
        "tt2": jnp.asarray(_pool_lane_mats(8, 32)),
        "w3":  _pack_conv3(params["mid_w"], 4),
        "wt1": _pack_convT(params["dec1_w"], 4),
        "pe1": jnp.asarray(_interleave_mats(B, 4, 8)),
        "wt2": _pack_convT(params["dec2_w"], 8),
        "pe2": jnp.asarray(_interleave_mats(B, 8, 17)),
        "wl":  jnp.kron(jnp.eye(16, dtype=jnp.float32),
                        params["out_w"].reshape(1, 16).T),
    }
    wbuf = jnp.zeros((total, _LANES), jnp.float32)
    for name, m in mats.items():
        off, r, c = layout[name]
        m = jnp.asarray(m, jnp.float32)
        assert m.shape[0] == r and m.shape[1] <= c, (name, m.shape, (r, c))
        wbuf = wbuf.at[off:off + r, :m.shape[1]].set(m)
    wbuf = wbuf.astype(jnp.bfloat16)   # 0/1 structure matrices are exact in bf16

    bbuf = jnp.zeros((_N_BIAS_ROWS, 256), jnp.float32)
    bbuf = bbuf.at[0, :].set(jnp.tile(params["enc1_b"], 16))     # W=16, C=16
    bbuf = bbuf.at[1, :].set(jnp.tile(params["enc2_b"], 8))      # W=8,  C=32
    bbuf = bbuf.at[2, :].set(jnp.tile(params["mid_b"], 4))       # W=4,  C=64
    bbuf = bbuf.at[3, :].set(jnp.tile(params["dec1_b"], 8))      # W=8,  C=32
    bbuf = bbuf.at[4, :].set(jnp.tile(params["dec2_b"], 16))     # W=16, C=16
    bbuf = bbuf.at[5, :16].set(jnp.broadcast_to(params["out_b"], (16,)))
    return {"w": wbuf, "b": bbuf}


# ----------------------------------------------------------------------------
# Parameters (deterministic, torch layouts / shapes from nn.Module.__init__)
# ----------------------------------------------------------------------------
def init_params(key):
    ks = jax.random.split(key, 12)
    s = 0.1

    def n(k, shape):
        return (s * jax.random.normal(k, shape)).astype(jnp.float32)

    return {
        "enc1_w": n(ks[0], (16, 1, 3, 3)),   "enc1_b": n(ks[1], (16,)),
        "enc2_w": n(ks[2], (32, 16, 3, 3)),  "enc2_b": n(ks[3], (32,)),
        "mid_w":  n(ks[4], (64, 32, 3, 3)),  "mid_b":  n(ks[5], (64,)),
        "dec1_w": n(ks[6], (64, 32, 2, 2)),  "dec1_b": n(ks[7], (32,)),   # ConvT
        "dec2_w": n(ks[8], (32, 16, 2, 2)),  "dec2_b": n(ks[9], (16,)),   # ConvT
        "out_w":  n(ks[10], (1, 16, 1, 1)),  "out_b":  n(ks[11], (1,)),
    }


# ----------------------------------------------------------------------------
# Forward pass: one fused pallas_call (matches PyTorch UNet.forward)
# ----------------------------------------------------------------------------
@jax.jit
def unet_forward(packed, x_nchw):
    B = x_nchw.shape[0]
    layout, _ = _layout(B)
    # NCHW with C == 1: row = b*16 + h, lane = w  (pure metadata reshape)
    x0 = x_nchw.astype(jnp.float32).reshape(B * 16, 16)

    # TODO(synk): for batch >> 2 (esp. v7x with 2 TensorCores), add a grid axis
    # over batch blocks with dimension_semantics=("parallel",) and per-block
    # x/out BlockSpecs; at B=2 a single program is latency-optimal.
    out = pl.pallas_call(
        _build_kernel(layout),
        out_shape=jax.ShapeDtypeStruct((B * 17, 128), jnp.float32),
        in_specs=[
            pl.BlockSpec(memory_space=pltpu.MemorySpace.VMEM),   # x
            pl.BlockSpec(memory_space=pltpu.MemorySpace.VMEM),   # packed weights (bf16)
            pl.BlockSpec(memory_space=pltpu.MemorySpace.VMEM),   # packed biases (f32)
        ],
        out_specs=pl.BlockSpec(memory_space=pltpu.MemorySpace.VMEM),
    )(x0, packed["w"], packed["b"])
    return out[:, :16].reshape(B, 1, 17, 16)        # NCHW, C == 1


# ----------------------------------------------------------------------------
if __name__ == "__main__":
    key = jax.random.PRNGKey(0)
    pkey, xkey = jax.random.split(key)
    params = init_params(pkey)
    x = jax.random.normal(xkey, (2, 1, 16, 16), dtype=jnp.float32)

    packed = pack_params(params, batch=2)      # one-time weight/layout packing
    out = unet_forward(packed, x)
    out = jax.block_until_ready(out)

    assert out.shape == (2, 1, 17, 16), out.shape
    assert bool(jnp.all(jnp.isfinite(out)))
    assert bool(jnp.all((out > 0.0) & (out < 1.0)))   # sigmoid range
    print("KERNEL_OK")
</pallas_src>

<mosaic_0001>
module attributes {stable_mosaic.version = 11 : i64} {
  func.func @kernel(%arg0: memref<32x16xf32, #tpu.memory_space<vmem>>, %arg1: memref<2208x512xbf16, #tpu.memory_space<vmem>>, %arg2: memref<6x256xf32, #tpu.memory_space<vmem>>, %arg3: memref<34x128xf32, #tpu.memory_space<vmem>>) attributes {dimension_semantics = [], scalar_prefetch = 0 : i64, scratch_operands = 0 : i64, tpu.core_type = #tpu.core_type<tc>} {
    %c0 = arith.constant 0 : index
    %c0_0 = arith.constant 0 : index
    %0 = vector.load %arg0[%c0, %c0_0] : memref<32x16xf32, #tpu.memory_space<vmem>>, vector<32x16xf32>
    %1 = tpu.iota {dimensions = array<i32: 0>} : vector<32x16xi32>
    %c16_i32 = arith.constant 16 : i32
    %c0_i32 = arith.constant 0 : i32
    %2 = arith.cmpi eq, %c16_i32, %c0_i32 : i32
    %c1_i32 = arith.constant 1 : i32
    %3 = arith.select %2, %c1_i32, %c16_i32 : i32
    %4 = vector.broadcast %3 : i32 to vector<32x16xi32>
    %5 = arith.remsi %1, %4 : vector<32x16xi32>
    %c0_i32_1 = arith.constant 0 : i32
    %6 = vector.broadcast %c0_i32_1 : i32 to vector<32x16xi32>
    %7 = arith.cmpi ne, %5, %6 : vector<32x16xi32>
    %c0_i32_2 = arith.constant 0 : i32
    %8 = vector.broadcast %c0_i32_2 : i32 to vector<32x16xi32>
    %9 = arith.cmpi slt, %5, %8 : vector<32x16xi32>
    %c0_i32_3 = arith.constant 0 : i32
    %10 = arith.cmpi slt, %3, %c0_i32_3 : i32
    %11 = vector.broadcast %10 : i1 to vector<32x16xi1>
    %12 = vector.broadcast %11 : vector<32x16xi1> to vector<32x16xi1>
    %13 = arith.xori %9, %12 : vector<32x16xi1>
    %14 = arith.andi %13, %7 : vector<32x16xi1>
    %15 = vector.broadcast %3 : i32 to vector<32x16xi32>
    %16 = arith.addi %5, %15 : vector<32x16xi32>
    %17 = arith.select %14, %16, %5 : vector<32x16xi1>, vector<32x16xi32>
    %c0_i32_4 = arith.constant 0 : i32
    %18 = vector.broadcast %c0_i32_4 : i32 to vector<32x16xi32>
    %19 = arith.cmpi eq, %17, %18 : vector<32x16xi32>
    %20 = vector.extract_strided_slice %0 {offsets = [31, 0], sizes = [1, 16], strides = [1, 1]} : vector<32x16xf32> to vector<1x16xf32>
    %21 = vector.extract_strided_slice %0 {offsets = [0, 0], sizes = [31, 16], strides = [1, 1]} : vector<32x16xf32> to vector<31x16xf32>
    %22 = tpu.concatenate %20, %21 in 0 : vector<1x16xf32>, vector<31x16xf32> -> vector<32x16xf32>
    %cst = arith.constant 0.000000e+00 : f32
    %23 = vector.broadcast %cst : f32 to vector<32x16xf32>
    %24 = arith.select %19, %23, %22 : vector<32x16xi1>, vector<32x16xf32>
    %c15_i32 = arith.constant 15 : i32
    %25 = vector.broadcast %c15_i32 : i32 to vector<32x16xi32>
    %26 = arith.cmpi eq, %17, %25 : vector<32x16xi32>
    %27 = vector.extract_strided_slice %0 {offsets = [1, 0], sizes = [31, 16], strides = [1, 1]} : vector<32x16xf32> to vector<31x16xf32>
    %28 = vector.extract_strided_slice %0 {offsets = [0, 0], sizes = [1, 16], strides = [1, 1]} : vector<32x16xf32> to vector<1x16xf32>
    %29 = tpu.concatenate %27, %28 in 0 : vector<31x16xf32>, vector<1x16xf32> -> vector<32x16xf32>
    %cst_5 = arith.constant 0.000000e+00 : f32
    %30 = vector.broadcast %cst_5 : f32 to vector<32x16xf32>
    %31 = arith.select %26, %30, %29 : vector<32x16xi1>, vector<32x16xf32>
    %32 = tpu.concatenate %24, %0, %31 in 1 : vector<32x16xf32>, vector<32x16xf32>, vector<32x16xf32> -> vector<32x48xf32>
    %c0_6 = arith.constant 0 : index
    %c0_7 = arith.constant 0 : index
    %33 = vector.load %arg1[%c0_6, %c0_7] : memref<2208x512xbf16, #tpu.memory_space<vmem>>, vector<48x256xbf16>
    %34 = arith.truncf %32 : vector<32x48xf32> to vector<32x48xbf16>
    %cst_8 = arith.constant dense<0.000000e+00> : vector<32x256xf32>
    %35 = tpu.matmul %34, %33, %cst_8 {dimension_numbers = #tpu.dot_dimension_numbers<[1], [0], [0], [1], [0, 0, 1, 1], [], []>} : vector<32x48xbf16>, vector<48x256xbf16>, vector<32x256xf32> -> vector<32x256xf32>
    %c0_9 = arith.constant 0 : index
    %c0_10 = arith.constant 0 : index
    %36 = vector.load %arg2[%c0_9, %c0_10] : memref<6x256xf32, #tpu.memory_space<vmem>>, vector<1x256xf32>
    %37 = vector.broadcast %36 : vector<1x256xf32> to vector<32x256xf32>
    %38 = arith.addf %35, %37 : vector<32x256xf32>
    %cst_11 = arith.constant 0.000000e+00 : f32
    %39 = vector.broadcast %cst_11 : f32 to vector<32x256xf32>
    %40 = arith.maximumf %38, %39 : vector<32x256xf32>
    %c48 = arith.constant 48 : index
    %c0_12 = arith.constant 0 : index
    %41 = vector.load %arg1[%c48, %c0_12] : memref<2208x512xbf16, #tpu.memory_space<vmem>>, vector<32x32xbf16>
    %42 = arith.truncf %40 : vector<32x256xf32> to vector<32x256xbf16>
    %cst_13 = arith.constant dense<0.000000e+00> : vector<32x256xf32>
    %43 = tpu.matmul %41, %42, %cst_13 {dimension_numbers = #tpu.dot_dimension_numbers<[1], [0], [0], [1], [0, 0, 1, 1], [], []>} : vector<32x32xbf16>, vector<32x256xbf16>, vector<32x256xf32> -> vector<32x256xf32>
    %44 = vector.extract_strided_slice %43 {offsets = [0, 0], sizes = [16, 256], strides = [1, 1]} : vector<32x256xf32> to vector<16x256xf32>
    %45 = vector.extract_strided_slice %43 {offsets = [16, 0], sizes = [16, 256], strides = [1, 1]} : vector<32x256xf32> to vector<16x256xf32>
    %46 = arith.maximumf %44, %45 : vector<16x256xf32>
    %c80 = arith.constant 80 : index
    %c0_14 = arith.constant 0 : index
    %47 = vector.load %arg1[%c80, %c0_14] : memref<2208x512xbf16, #tpu.memory_space<vmem>>, vector<256x256xbf16>
    %48 = arith.truncf %46 : vector<16x256xf32> to vector<16x256xbf16>
    %cst_15 = arith.constant dense<0.000000e+00> : vector<16x256xf32>
    %49 = tpu.matmul %48, %47, %cst_15 {dimension_numbers = #tpu.dot_dimension_numbers<[1], [0], [0], [1], [0, 0, 1, 1], [], []>} : vector<16x256xbf16>, vector<256x256xbf16>, vector<16x256xf32> -> vector<16x256xf32>
    %50 = vector.extract_strided_slice %49 {offsets = [0, 0], sizes = [16, 128], strides = [1, 1]} : vector<16x256xf32> to vector<16x128xf32>
    %51 = vector.extract_strided_slice %49 {offsets = [0, 128], sizes = [16, 128], strides = [1, 1]} : vector<16x256xf32> to vector<16x128xf32>
    %52 = arith.maximumf %50, %51 : vector<16x128xf32>
    %53 = tpu.iota {dimensions = array<i32: 0>} : vector<16x128xi32>
    %c8_i32 = arith.constant 8 : i32
    %c0_i32_16 = arith.constant 0 : i32
    %54 = arith.cmpi eq, %c8_i32, %c0_i32_16 : i32
    %c1_i32_17 = arith.constant 1 : i32
    %55 = arith.select %54, %c1_i32_17, %c8_i32 : i32
    %56 = vector.broadcast %55 : i32 to vector<16x128xi32>
    %57 = arith.remsi %53, %56 : vector<16x128xi32>
    %c0_i32_18 = arith.constant 0 : i32
    %58 = vector.broadcast %c0_i32_18 : i32 to vector<16x128xi32>
    %59 = arith.cmpi ne, %57, %58 : vector<16x128xi32>
    %c0_i32_19 = arith.constant 0 : i32
    %60 = vector.broadcast %c0_i32_19 : i32 to vector<16x128xi32>
    %61 = arith.cmpi slt, %57, %60 : vector<16x128xi32>
    %c0_i32_20 = arith.constant 0 : i32
    %62 = arith.cmpi slt, %55, %c0_i32_20 : i32
    %63 = vector.broadcast %62 : i1 to vector<16x128xi1>
    %64 = vector.broadcast %63 : vector<16x128xi1> to vector<16x128xi1>
    %65 = arith.xori %61, %64 : vector<16x128xi1>
    %66 = arith.andi %65, %59 : vector<16x128xi1>
    %67 = vector.broadcast %55 : i32 to vector<16x128xi32>
    %68 = arith.addi %57, %67 : vector<16x128xi32>
    %69 = arith.select %66, %68, %57 : vector<16x128xi1>, vector<16x128xi32>
    %c0_i32_21 = arith.constant 0 : i32
    %70 = vector.broadcast %c0_i32_21 : i32 to vector<16x128xi32>
    %71 = arith.cmpi eq, %69, %70 : vector<16x128xi32>
    %72 = vector.extract_strided_slice %52 {offsets = [15, 0], sizes = [1, 128], strides = [1, 1]} : vector<16x128xf32> to vector<1x128xf32>
    %73 = vector.extract_strided_slice %52 {offsets = [0, 0], sizes = [15, 128], strides = [1, 1]} : vector<16x128xf32> to vector<15x128xf32>
    %74 = tpu.concatenate %72, %73 in 0 : vector<1x128xf32>, vector<15x128xf32> -> vector<16x128xf32>
    %cst_22 = arith.constant 0.000000e+00 : f32
    %75 = vector.broadcast %cst_22 : f32 to vector<16x128xf32>
    %76 = arith.select %71, %75, %74 : vector<16x128xi1>, vector<16x128xf32>
    %c7_i32 = arith.constant 7 : i32
    %77 = vector.broadcast %c7_i32 : i32 to vector<16x128xi32>
    %78 = arith.cmpi eq, %69, %77 : vector<16x128xi32>
    %79 = vector.extract_strided_slice %52 {offsets = [1, 0], sizes = [15, 128], strides = [1, 1]} : vector<16x128xf32> to vector<15x128xf32>
    %80 = vector.extract_strided_slice %52 {offsets = [0, 0], sizes = [1, 128], strides = [1, 1]} : vector<16x128xf32> to vector<1x128xf32>
    %81 = tpu.concatenate %79, %80 in 0 : vector<15x128xf32>, vector<1x128xf32> -> vector<16x128xf32>
    %cst_23 = arith.constant 0.000000e+00 : f32
    %82 = vector.broadcast %cst_23 : f32 to vector<16x128xf32>
    %83 = arith.select %78, %82, %81 : vector<16x128xi1>, vector<16x128xf32>
    %84 = tpu.concatenate %76, %52, %83 in 1 : vector<16x128xf32>, vector<16x128xf32>, vector<16x128xf32> -> vector<16x384xf32>
    %c336 = arith.constant 336 : index
    %c0_24 = arith.constant 0 : index
    %85 = vector.load %arg1[%c336, %c0_24] : memref<2208x512xbf16, #tpu.memory_space<vmem>>, vector<384x256xbf16>
    %86 = arith.truncf %84 : vector<16x384xf32> to vector<16x384xbf16>
    %cst_25 = arith.constant dense<0.000000e+00> : vector<16x256xf32>
    %87 = tpu.matmul %86, %85, %cst_25 {dimension_numbers = #tpu.dot_dimension_numbers<[1], [0], [0], [1], [0, 0, 1, 1], [], []>} : vector<16x384xbf16>, vector<384x256xbf16>, vector<16x256xf32> -> vector<16x256xf32>
    %c1 = arith.constant 1 : index
    %c0_26 = arith.constant 0 : index
    %88 = vector.load %arg2[%c1, %c0_26] : memref<6x256xf32, #tpu.memory_space<vmem>>, vector<1x256xf32>
    %89 = vector.broadcast %88 : vector<1x256xf32> to vector<16x256xf32>
    %90 = arith.addf %87, %89 : vector<16x256xf32>
    %cst_27 = arith.constant 0.000000e+00 : f32
    %91 = vector.broadcast %cst_27 : f32 to vector<16x256xf32>
    %92 = arith.maximumf %90, %91 : vector<16x256xf32>
    %c720 = arith.constant 720 : index
    %c0_28 = arith.constant 0 : index
    %93 = vector.load %arg1[%c720, %c0_28] : memref<2208x512xbf16, #tpu.memory_space<vmem>>, vector<16x16xbf16>
    %94 = arith.truncf %92 : vector<16x256xf32> to vector<16x256xbf16>
    %cst_29 = arith.constant dense<0.000000e+00> : vector<16x256xf32>
    %95 = tpu.matmul %93, %94, %cst_29 {dimension_numbers = #tpu.dot_dimension_numbers<[1], [0], [0], [1], [0, 0, 1, 1], [], []>} : vector<16x16xbf16>, vector<16x256xbf16>, vector<16x256xf32> -> vector<16x256xf32>
    %96 = vector.extract_strided_slice %95 {offsets = [0, 0], sizes = [8, 256], strides = [1, 1]} : vector<16x256xf32> to vector<8x256xf32>
    %97 = vector.extract_strided_slice %95 {offsets = [8, 0], sizes = [8, 256], strides = [1, 1]} : vector<16x256xf32> to vector<8x256xf32>
    %98 = arith.maximumf %96, %97 : vector<8x256xf32>
    %c736 = arith.constant 736 : index
    %c0_30 = arith.constant 0 : index
    %99 = vector.load %arg1[%c736, %c0_30] : memref<2208x512xbf16, #tpu.memory_space<vmem>>, vector<256x256xbf16>
    %100 = arith.truncf %98 : vector<8x256xf32> to vector<8x256xbf16>
    %cst_31 = arith.constant dense<0.000000e+00> : vector<8x256xf32>
    %101 = tpu.matmul %100, %99, %cst_31 {dimension_numbers = #tpu.dot_dimension_numbers<[1], [0], [0], [1], [0, 0, 1, 1], [], []>} : vector<8x256xbf16>, vector<256x256xbf16>, vector<8x256xf32> -> vector<8x256xf32>
    %102 = vector.extract_strided_slice %101 {offsets = [0, 0], sizes = [8, 128], strides = [1, 1]} : vector<8x256xf32> to vector<8x128xf32>
    %103 = vector.extract_strided_slice %101 {offsets = [0, 128], sizes = [8, 128], strides = [1, 1]} : vector<8x256xf32> to vector<8x128xf32>
    %104 = arith.maximumf %102, %103 : vector<8x128xf32>
    %105 = tpu.iota {dimensions = array<i32: 0>} : vector<8x128xi32>
    %c4_i32 = arith.constant 4 : i32
    %c0_i32_32 = arith.constant 0 : i32
    %106 = arith.cmpi eq, %c4_i32, %c0_i32_32 : i32
    %c1_i32_33 = arith.constant 1 : i32
    %107 = arith.select %106, %c1_i32_33, %c4_i32 : i32
    %108 = vector.broadcast %107 : i32 to vector<8x128xi32>
    %109 = arith.remsi %105, %108 : vector<8x128xi32>
    %c0_i32_34 = arith.constant 0 : i32
    %110 = vector.broadcast %c0_i32_34 : i32 to vector<8x128xi32>
    %111 = arith.cmpi ne, %109, %110 : vector<8x128xi32>
    %c0_i32_35 = arith.constant 0 : i32
    %112 = vector.broadcast %c0_i32_35 : i32 to vector<8x128xi32>
    %113 = arith.cmpi slt, %109, %112 : vector<8x128xi32>
    %c0_i32_36 = arith.constant 0 : i32
    %114 = arith.cmpi slt, %107, %c0_i32_36 : i32
    %115 = vector.broadcast %114 : i1 to vector<8x128xi1>
    %116 = vector.broadcast %115 : vector<8x128xi1> to vector<8x128xi1>
    %117 = arith.xori %113, %116 : vector<8x128xi1>
    %118 = arith.andi %117, %111 : vector<8x128xi1>
    %119 = vector.broadcast %107 : i32 to vector<8x128xi32>
    %120 = arith.addi %109, %119 : vector<8x128xi32>
    %121 = arith.select %118, %120, %109 : vector<8x128xi1>, vector<8x128xi32>
    %c0_i32_37 = arith.constant 0 : i32
    %122 = vector.broadcast %c0_i32_37 : i32 to vector<8x128xi32>
    %123 = arith.cmpi eq, %121, %122 : vector<8x128xi32>
    %124 = vector.extract_strided_slice %104 {offsets = [7, 0], sizes = [1, 128], strides = [1, 1]} : vector<8x128xf32> to vector<1x128xf32>
    %125 = vector.extract_strided_slice %104 {offsets = [0, 0], sizes = [7, 128], strides = [1, 1]} : vector<8x128xf32> to vector<7x128xf32>
    %126 = tpu.concatenate %124, %125 in 0 : vector<1x128xf32>, vector<7x128xf32> -> vector<8x128xf32>
    %cst_38 = arith.constant 0.000000e+00 : f32
    %127 = vector.broadcast %cst_38 : f32 to vector<8x128xf32>
    %128 = arith.select %123, %127, %126 : vector<8x128xi1>, vector<8x128xf32>
    %c3_i32 = arith.constant 3 : i32
    %129 = vector.broadcast %c3_i32 : i32 to vector<8x128xi32>
    %130 = arith.cmpi eq, %121, %129 : vector<8x128xi32>
    %131 = vector.extract_strided_slice %104 {offsets = [1, 0], sizes = [7, 128], strides = [1, 1]} : vector<8x128xf32> to vector<7x128xf32>
    %132 = vector.extract_strided_slice %104 {offsets = [0, 0], sizes = [1, 128], strides = [1, 1]} : vector<8x128xf32> to vector<1x128xf32>
    %133 = tpu.concatenate %131, %132 in 0 : vector<7x128xf32>, vector<1x128xf32> -> vector<8x128xf32>
    %cst_39 = arith.constant 0.000000e+00 : f32
    %134 = vector.broadcast %cst_39 : f32 to vector<8x128xf32>
    %135 = arith.select %130, %134, %133 : vector<8x128xi1>, vector<8x128xf32>
    %136 = tpu.concatenate %128, %104, %135 in 1 : vector<8x128xf32>, vector<8x128xf32>, vector<8x128xf32> -> vector<8x384xf32>
    %c992 = arith.constant 992 : index
    %c0_40 = arith.constant 0 : index
    %137 = vector.load %arg1[%c992, %c0_40] : memref<2208x512xbf16, #tpu.memory_space<vmem>>, vector<384x256xbf16>
    %138 = arith.truncf %136 : vector<8x384xf32> to vector<8x384xbf16>
    %cst_41 = arith.constant dense<0.000000e+00> : vector<8x256xf32>
    %139 = tpu.matmul %138, %137, %cst_41 {dimension_numbers = #tpu.dot_dimension_numbers<[1], [0], [0], [1], [0, 0, 1, 1], [], []>} : vector<8x384xbf16>, vector<384x256xbf16>, vector<8x256xf32> -> vector<8x256xf32>
    %c2 = arith.constant 2 : index
    %c0_42 = arith.constant 0 : index
    %140 = vector.load %arg2[%c2, %c0_42] : memref<6x256xf32, #tpu.memory_space<vmem>>, vector<1x256xf32>
    %141 = vector.broadcast %140 : vector<1x256xf32> to vector<8x256xf32>
    %142 = arith.addf %139, %141 : vector<8x256xf32>
    %cst_43 = arith.constant 0.000000e+00 : f32
    %143 = vector.broadcast %cst_43 : f32 to vector<8x256xf32>
    %144 = arith.maximumf %142, %143 : vector<8x256xf32>
    %c1376 = arith.constant 1376 : index
    %c0_44 = arith.constant 0 : index
    %145 = vector.load %arg1[%c1376, %c0_44] : memref<2208x512xbf16, #tpu.memory_space<vmem>>, vector<256x512xbf16>
    %146 = arith.truncf %144 : vector<8x256xf32> to vector<8x256xbf16>
    %cst_45 = arith.constant dense<0.000000e+00> : vector<8x512xf32>
    %147 = tpu.matmul %146, %145, %cst_45 {dimension_numbers = #tpu.dot_dimension_numbers<[1], [0], [0], [1], [0, 0, 1, 1], [], []>} : vector<8x256xbf16>, vector<256x512xbf16>, vector<8x512xf32> -> vector<8x512xf32>
    %148 = vector.extract_strided_slice %147 {offsets = [0, 0], sizes = [8, 256], strides = [1, 1]} : vector<8x512xf32> to vector<8x256xf32>
    %149 = vector.extract_strided_slice %147 {offsets = [0, 256], sizes = [8, 256], strides = [1, 1]} : vector<8x512xf32> to vector<8x256xf32>
    %150 = tpu.concatenate %148, %149 in 0 : vector<8x256xf32>, vector<8x256xf32> -> vector<16x256xf32>
    %c1632 = arith.constant 1632 : index
    %c0_46 = arith.constant 0 : index
    %151 = vector.load %arg1[%c1632, %c0_46] : memref<2208x512xbf16, #tpu.memory_space<vmem>>, vector<16x16xbf16>
    %152 = arith.truncf %150 : vector<16x256xf32> to vector<16x256xbf16>
    %cst_47 = arith.constant dense<0.000000e+00> : vector<16x256xf32>
    %153 = tpu.matmul %151, %152, %cst_47 {dimension_numbers = #tpu.dot_dimension_numbers<[1], [0], [0], [1], [0, 0, 1, 1], [], []>} : vector<16x16xbf16>, vector<16x256xbf16>, vector<16x256xf32> -> vector<16x256xf32>
    %c3 = arith.constant 3 : index
    %c0_48 = arith.constant 0 : index
    %154 = vector.load %arg2[%c3, %c0_48] : memref<6x256xf32, #tpu.memory_space<vmem>>, vector<1x256xf32>
    %155 = vector.broadcast %154 : vector<1x256xf32> to vector<16x256xf32>
    %156 = arith.addf %153, %155 : vector<16x256xf32>
    %cst_49 = arith.constant 0.000000e+00 : f32
    %157 = vector.broadcast %cst_49 : f32 to vector<16x256xf32>
    %158 = arith.maximumf %156, %157 : vector<16x256xf32>
    %c1648 = arith.constant 1648 : index
    %c0_50 = arith.constant 0 : index
    %159 = vector.load %arg1[%c1648, %c0_50] : memref<2208x512xbf16, #tpu.memory_space<vmem>>, vector<256x512xbf16>
    %160 = arith.truncf %158 : vector<16x256xf32> to vector<16x256xbf16>
    %cst_51 = arith.constant dense<0.000000e+00> : vector<16x512xf32>
    %161 = tpu.matmul %160, %159, %cst_51 {dimension_numbers = #tpu.dot_dimension_numbers<[1], [0], [0], [1], [0, 0, 1, 1], [], []>} : vector<16x256xbf16>, vector<256x512xbf16>, vector<16x512xf32> -> vector<16x512xf32>
    %162 = vector.extract_strided_slice %161 {offsets = [0, 0], sizes = [16, 256], strides = [1, 1]} : vector<16x512xf32> to vector<16x256xf32>
    %163 = vector.extract_strided_slice %161 {offsets = [0, 256], sizes = [16, 256], strides = [1, 1]} : vector<16x512xf32> to vector<16x256xf32>
    %164 = tpu.concatenate %162, %163 in 0 : vector<16x256xf32>, vector<16x256xf32> -> vector<32x256xf32>
    %c1904 = arith.constant 1904 : index
    %c0_52 = arith.constant 0 : index
    %165 = vector.load %arg1[%c1904, %c0_52] : memref<2208x512xbf16, #tpu.memory_space<vmem>>, vector<34x32xbf16>
    %166 = arith.truncf %164 : vector<32x256xf32> to vector<32x256xbf16>
    %cst_53 = arith.constant dense<0.000000e+00> : vector<34x256xf32>
    %167 = tpu.matmul %165, %166, %cst_53 {dimension_numbers = #tpu.dot_dimension_numbers<[1], [0], [0], [1], [0, 0, 1, 1], [], []>} : vector<34x32xbf16>, vector<32x256xbf16>, vector<34x256xf32> -> vector<34x256xf32>
    %c4 = arith.constant 4 : index
    %c0_54 = arith.constant 0 : index
    %168 = vector.load %arg2[%c4, %c0_54] : memref<6x256xf32, #tpu.memory_space<vmem>>, vector<1x256xf32>
    %169 = vector.broadcast %168 : vector<1x256xf32> to vector<34x256xf32>
    %170 = arith.addf %167, %169 : vector<34x256xf32>
    %cst_55 = arith.constant 0.000000e+00 : f32
    %171 = vector.broadcast %cst_55 : f32 to vector<34x256xf32>
    %172 = arith.maximumf %170, %171 : vector<34x256xf32>
    %c1952 = arith.constant 1952 : index
    %c0_56 = arith.constant 0 : index
    %173 = vector.load %arg1[%c1952, %c0_56] : memref<2208x512xbf16, #tpu.memory_space<vmem>>, vector<256x128xbf16>
    %174 = arith.truncf %172 : vector<34x256xf32> to vector<34x256xbf16>
    %cst_57 = arith.constant dense<0.000000e+00> : vector<34x128xf32>
    %175 = tpu.matmul %174, %173, %cst_57 {dimension_numbers = #tpu.dot_dimension_numbers<[1], [0], [0], [1], [0, 0, 1, 1], [], []>} : vector<34x256xbf16>, vector<256x128xbf16>, vector<34x128xf32> -> vector<34x128xf32>
    %c5 = arith.constant 5 : index
    %c0_58 = arith.constant 0 : index
    %176 = vector.load %arg2[%c5, %c0_58] : memref<6x256xf32, #tpu.memory_space<vmem>>, vector<1x128xf32>
    %177 = vector.broadcast %176 : vector<1x128xf32> to vector<34x128xf32>
    %178 = arith.addf %175, %177 : vector<34x128xf32>
    %cst_59 = arith.constant 0.000000e+00 : f32
    %179 = vector.broadcast %cst_59 : f32 to vector<34x128xf32>
    %180 = arith.subf %179, %178 : vector<34x128xf32>
    %181 = math.exp %180 : vector<34x128xf32>
    %cst_60 = arith.constant 1.000000e+00 : f32
    %182 = vector.broadcast %cst_60 : f32 to vector<34x128xf32>
    %183 = arith.addf %182, %181 : vector<34x128xf32>
    %cst_61 = arith.constant 1.000000e+00 : f32
    %184 = vector.broadcast %cst_61 : f32 to vector<34x128xf32>
    %185 = arith.divf %184, %183 : vector<34x128xf32>
    %c0_62 = arith.constant 0 : index
    %c0_63 = arith.constant 0 : index
    %186 = vector.load %arg3[%c0_62, %c0_63] : memref<34x128xf32, #tpu.memory_space<vmem>>, vector<34x128xf32>
    tpu.vector_store %arg3[%c0_62, %c0_63], %185 {strides = array<i32>} : memref<34x128xf32, #tpu.memory_space<vmem>>, vector<34x128xf32>,
    return
  }
}

</mosaic_0001>

<llo_original>
// kernel: unet_forward.1
$region0: #{unet_forward.1}
  #allocation0 [shape = 'u32[]', space=smem, size = 0x4, offset = 0x4, fixed_abs, tag = 'smem constant byte address 0x4 - core index']
  #allocation1 [shape = 'u32[144,128]{1,0:T(1,128)}', space=vmem, size = 0x12000, scoped, tag = 'internal scratch']
  %s0 = inlined_call_operand.hbm [shape: f32[32,16], index: 0, kind: input, shape index: {}]
  %s1 = inlined_call_operand.hbm [shape: bf16[2208,512], index: 1, kind: input, shape index: {}]
  %s2 = inlined_call_operand.hbm [shape: f32[6,256], index: 2, kind: input, shape index: {}]
  %s3 = inlined_call_operand.vmem [shape: f32[34,128], index: 3, kind: output, shape index: {}]
  %s4 = sld [smem:[#allocation0]]
  $region34: #{unet_forward.1} parent=0
    _
  %s6 = ssub.s32 1, %s4
  %s7 = scalar_select 0, %s6, %s4
  $region1: #{unet_forward.1} parent=0
    #allocation2 [shape = 'u8[16384]{0}', space=vmem, size = 0x4000, scoped, tag = 'input window, operand 0, single buffered']
    #allocation3 [shape = 's32[1]{0}', space=sflag, size = 0x4, scoped, tag = 'scoped memory for unet_forward.1']
    #allocation4 [shape = 'u8[2260992]{0}', space=vmem, size = 0x228000, scoped, tag = 'input window, operand 1, single buffered']
    #allocation5 [shape = 's32[1]{0}', space=sflag, size = 0x4, scoped, tag = 'scoped memory for unet_forward.1']
    #allocation6 [shape = 'u8[8192]{0}', space=vmem, size = 0x2000, scoped, tag = 'input window, operand 2, single buffered']
    %8 = vsyncpa [#allocation3], 0
    %9 = vsyncpa [#allocation5], 0
    // Predicated region
    $region2: #{unet_forward.1} parent=1 // pred_check
      _
    $region3: #{unet_forward.1} parent=1 // pred_check_branch
      %11 = sbr.rel (0) target = $region5
    $region4: #{unet_forward.1} parent=1 // pred_region
      %s13 = ssub.s32 512, 512
      %14 = vsyncadd [#allocation3], %s13
      %s15 = sshll.u32 [#allocation2], 4
      %s16 = int_to_ptr.vmem [resolvable:$true] %s15
      %21 = dma.hbm_to_vmem [thread:$0]  %s0, 512, %s16, [#allocation3], 128, 128, 8
    $region5: #{unet_forward.1} parent=1 // pred_fallthru
      _
    // Predicated region
    $region6: #{unet_forward.1} parent=1 // pred_check
      _
    $region7: #{unet_forward.1} parent=1 // pred_check_branch
      %23 = sbr.rel (0) target = $region9
    $region8: #{unet_forward.1} parent=1 // pred_region
      %s25 = ssub.s32 70656, 70656
      %26 = vsyncadd [#allocation5], %s25
      %s27 = sshll.u32 [#allocation4], 4
      %s28 = int_to_ptr.vmem [resolvable:$true] %s27
      %33 = dma.hbm_to_vmem [thread:$0]  %s1, 70656, %s28, [#allocation5], 256, 256, 16
    $region9: #{unet_forward.1} parent=1 // pred_fallthru
      _
    // Predicated region
    $region10: #{unet_forward.1} parent=1 // pred_check
      _
    $region11: #{unet_forward.1} parent=1 // pred_check_branch
      %35 = sbr.rel (0) target = $region13
    $region12: #{unet_forward.1} parent=1 // pred_region
      %s37 = ssub.s32 256, 256
      %38 = vsyncadd [#allocation5], %s37
      %s40 = sshll.u32 [#allocation6], 4
      %s41 = int_to_ptr.vmem [resolvable:$true] %s40
      %43 = dma.hbm_to_vmem [thread:$0]  %s2, 256, %s41, [#allocation5]
    $region13: #{unet_forward.1} parent=1 // pred_fallthru
      _
    // Predicated region
    $region14: #{unet_forward.1} parent=1 // pred_check
      _
    $region15: #{unet_forward.1} parent=1 // pred_check_branch
      %45 = sbr.rel (0) target = $region17
    $region16: #{unet_forward.1} parent=1 // pred_region
      %46 = dma.done [#allocation3], 512
    $region17: #{unet_forward.1} parent=1 // pred_fallthru
      _
    // Predicated region
    $region18: #{unet_forward.1} parent=1 // pred_check
      _
    $region19: #{unet_forward.1} parent=1 // pred_check_branch
      %48 = sbr.rel (0) target = $region21
    $region20: #{unet_forward.1} parent=1 // pred_region
      %49 = dma.done [#allocation5], 70656
    $region21: #{unet_forward.1} parent=1 // pred_fallthru
      _
    // Predicated region
    $region22: #{unet_forward.1} parent=1 // pred_check
      _
    $region23: #{unet_forward.1} parent=1 // pred_check_branch
      %51 = sbr.rel (0) target = $region25
    $region24: #{unet_forward.1} parent=1 // pred_region
      %52 = dma.done [#allocation5], 256
    $region25: #{unet_forward.1} parent=1 // pred_fallthru
      _
    %v54 = vld [vmem:[#allocation2] sm:$0xff]
    %v55 = vld [vmem:[#allocation2 + $0x8] sm:$0xff]
    %v56 = vld [vmem:[#allocation2 + $0x10] sm:$0xff]
    %v57 = vld [vmem:[#allocation2 + $0x18] sm:$0xff]
    %v58 = vlaneseq
    %v59 = vshrl.u32 %v58, 7
    %v60 = vadd.s32 %v59, 8
    %v61 = vadd.s32 %v59, 16
    %v62 = vadd.s32 %v59, 24
    %vm63 = vcmp.lt.s32.totalorder %v59, 0
    %v64 = vsub.s32 0, %v59
    %v65 = vsel %vm63, %v64, %v59
    %v66 = vshrl.u32 %v65, 4
    %v67 = vand.u32 %v65, 15
    %v68 = vsub.s32 0, %v67
    %v69 = vsel %vm63, %v68, %v67
    %vm70 = vcmp.lt.s32.totalorder %v60, 0
    %v71 = vsub.s32 0, %v60
    %v72 = vsel %vm70, %v71, %v60
    %v73 = vshrl.u32 %v72, 4
    %v74 = vand.u32 %v72, 15
    %v75 = vsub.s32 0, %v74
    %v76 = vsel %vm70, %v75, %v74
    %vm77 = vcmp.lt.s32.totalorder %v61, 0
    %v78 = vsub.s32 0, %v61
    %v79 = vsel %vm77, %v78, %v61
    %v80 = vshrl.u32 %v79, 4
    %v81 = vand.u32 %v79, 15
    %v82 = vsub.s32 0, %v81
    %v83 = vsel %vm77, %v82, %v81
    %vm84 = vcmp.lt.s32.totalorder %v62, 0
    %v85 = vsub.s32 0, %v62
    %v86 = vsel %vm84, %v85, %v62
    %v87 = vshrl.u32 %v86, 4
    %v88 = vand.u32 %v86, 15
    %v89 = vsub.s32 0, %v88
    %v90 = vsel %vm84, %v89, %v88
    %vm91 = vcmp.ne.s32.totalorder %v69, 0
    %vm92 = vcmp.ne.s32.totalorder %v76, 0
    %vm93 = vcmp.ne.s32.totalorder %v83, 0
    %vm94 = vcmp.ne.s32.totalorder %v90, 0
    %vm95 = vcmp.lt.s32.totalorder %v69, 0
    %vm96 = vcmp.lt.s32.totalorder %v76, 0
    %vm97 = vcmp.lt.s32.totalorder %v83, 0
    %vm98 = vcmp.lt.s32.totalorder %v90, 0
    %vm99 = vmand %vm95, %vm91
    %vm100 = vmand %vm96, %vm92
    %vm101 = vmand %vm97, %vm93
    %vm102 = vmand %vm98, %vm94
    %v103 = vadd.s32 %v69, 16
    %v104 = vadd.s32 %v76, 16
    %v105 = vadd.s32 %v83, 16
    %v106 = vadd.s32 %v90, 16
    %v107 = vsel %vm99, %v103, %v69
    %v108 = vsel %vm100, %v104, %v76
    %v109 = vsel %vm101, %v105, %v83
    %v110 = vsel %vm102, %v106, %v90
    %vm111 = vcmp.eq.s32.totalorder %v107, 0
    %vm112 = vcmp.eq.s32.totalorder %v108, 0
    %vm113 = vcmp.eq.s32.totalorder %v109, 0
    %vm114 = vcmp.eq.s32.totalorder %v110, 0
    %v116 = vrot.slane %v57, 7
    %vm121 = vcmask 1040384
    %v122 = vrot.slane %v54, 7
    %v123 = vrot.slane %v55, 7
    %v124 = vsel %vm121, %v122, %v123
    %v125 = vrot.slane %v56, 7
    %v126 = vsel %vm121, %v123, %v125
    %v127 = vsel %vm121, %v125, %v116
    %v132 = vsel %vm121, %v116, %v122
    %v133 = vsel %vm111, 0.0, %v132
    %v134 = vsel %vm112, 0.0, %v124
    %v135 = vsel %vm113, 0.0, %v126
    %v136 = vsel %vm114, 0.0, %v127
    %vm137 = vcmp.eq.s32.totalorder %v107, 15
    %vm138 = vcmp.eq.s32.totalorder %v108, 15
    %vm139 = vcmp.eq.s32.totalorder %v109, 15
    %vm140 = vcmp.eq.s32.totalorder %v110, 15
    %vm141 = vcmask 1046528
    %v142 = vrot.slane %v54, 1
    %v143 = vrot.slane %v55, 1
    %v144 = vsel %vm141, %v142, %v143
    %v145 = vrot.slane %v56, 1
    %v146 = vsel %vm141, %v143, %v145
    %v147 = vrot.slane %v57, 1
    %v148 = vsel %vm141, %v145, %v147
    %v154 = vsel %vm141, %v147, %v142
    %v155 = vsel %vm137, 0.0, %v144
    %v156 = vsel %vm138, 0.0, %v146
    %v157 = vsel %vm139, 0.0, %v148
    %v158 = vsel %vm140, 0.0, %v154
    %159 = vrot.lane.b32.xlu0 %v54, 16
    %v160 = vpop.permute.xlu0 %159
    %161 = vrot.lane.b32.xlu0 %v55, 16
    %v162 = vpop.permute.xlu0 %161
    %163 = vrot.lane.b32.xlu0 %v56, 16
    %v164 = vpop.permute.xlu0 %163
    %165 = vrot.lane.b32.xlu0 %v57, 16
    %v166 = vpop.permute.xlu0 %165
    %175 = vrot.lane.b32.xlu0 %v155, 32
    %v176 = vpop.permute.xlu0 %175
    %177 = vrot.lane.b32.xlu0 %v156, 32
    %v178 = vpop.permute.xlu0 %177
    %179 = vrot.lane.b32.xlu0 %v157, 32
    %v180 = vpop.permute.xlu0 %179
    %181 = vrot.lane.b32.xlu0 %v158, 32
    %v182 = vpop.permute.xlu0 %181
    %vm187 = vcmask 130048
    %v188 = vsel %vm187, %v133, %v160
    %v189 = vsel %vm187, %v134, %v162
    %v190 = vsel %vm187, %v135, %v164
    %v191 = vsel %vm187, %v136, %v166
    %vm192 = vcmask 261120
    %v193 = vsel %vm192, %v188, %v176
    %v194 = vsel %vm192, %v189, %v178
    %v195 = vsel %vm192, %v190, %v180
    %v196 = vsel %vm192, %v191, %v182
    %v197 = vld [vmem:[#allocation4] sm:$0xff]
    %v198 = vld [vmem:[#allocation4 + $0x10] sm:$0xff]
    %v199 = vld [vmem:[#allocation4 + $0x20] sm:$0xff]
    %v200 = vld [vmem:[#allocation4 + $0x30] sm:$0xff]
    %v201 = vld [vmem:[#allocation4 + $0x40] sm:$0xff]
    %v202 = vld [vmem:[#allocation4 + $0x50] sm:$0xff]
    %v203 = vpack.c.bf16 %v194, %v193
    %v204 = vpack.c.bf16 %v196, %v195
    %v205 = vld [vmem:[#allocation6] ss:$8 sm:$0x3]
    %v207 = vlaneseq
    %v208 = vshrl.u32 %v207, 7
    %v209 = vsub.s32 0, %v208
    %v210 = vrot.slane %v205, %v209
    %v211 = vlaneseq
    %v212 = vshrl.u32 %v211, 7
    %v213 = vsub.s32 1, %v212
    %v214 = vrot.slane %v205, %v213
    %v223 = vunpack.c.l.b16 %v197
    %v224 = vunpack.c.h.b16 %v197
    %v225 = vunpack.c.l.b16 %v198
    %v226 = vunpack.c.h.b16 %v198
    %v227 = vunpack.c.l.b16 %v199
    %v228 = vunpack.c.h.b16 %v199
    %v229 = vunpack.c.l.b16 %v200
    %v230 = vunpack.c.h.b16 %v200
    %v231 = vunpack.c.l.b16 %v201
    %v232 = vunpack.c.h.b16 %v201
    %v233 = vunpack.c.l.b16 %v202
    %v234 = vunpack.c.h.b16 %v202
    %v235 = vpack.c.b16 %v225, %v223
    %v236 = vpack.c.b16 %v226, %v224
    %v237 = vpack.c.b16 %v229, %v227
    %v238 = vpack.c.b16 %v230, %v228
    %v239 = vpack.c.b16 %v233, %v231
    %v240 = vpack.c.b16 %v234, %v232
    %vm247 = vcmask 392192
    %v249 = vsel %vm247, %v203, 0
    %v252 = vsel %vm247, %v204, 0
    %254 = vmatprep.subr.bf16.mxu0 %v236
    %255 = vmatpush1.bf16.msra.mxu0 %v235
    %256 = vmatprep.subr.bf16.mxu0 %v238
    %257 = vmatpush1.bf16.msra.mxu0 %v237
    %258 = vmatprep.subr.bf16.mxu0 %v240
    %259 = vmatpush1.bf16.msra.mxu0 %v239
    %260 = vmatprep.subr.bf16.mxu0 0
    %261 = vmatpush1.bf16.msra.mxu0 0
    %262 = vmatprep.subr.bf16.mxu0 0
    %263 = vmatpush1.bf16.msra.mxu0 0
    %264 = vmatprep.subr.bf16.mxu0 0
    %265 = vmatpush1.bf16.msra.mxu0 0
    %266 = vmatprep.subr.bf16.mxu0 0
    %267 = vmatpush1.bf16.msra.mxu0 0
    %268 = vmatprep.subr.bf16.mxu0 0
    %269 = vmatpush1.bf16.msra.mxu0 0
    %270 = vmatprep.subr.bf16.mxu0 0
    %271 = vmatpush1.bf16.msra.mxu0 0
    %272 = vmatprep.subr.bf16.mxu0 0
    %273 = vmatpush1.bf16.msra.mxu0 0
    %274 = vmatprep.subr.bf16.mxu0 0
    %275 = vmatpush1.bf16.msra.mxu0 0
    %276 = vmatprep.subr.bf16.mxu0 0
    %277 = vmatpush1.bf16.msra.mxu0 0
    %278 = vmatprep.subr.bf16.mxu0 0
    %279 = vmatpush1.bf16.msra.mxu0 0
    %280 = vmatprep.subr.bf16.mxu0 0
    %281 = vmatpush1.bf16.msra.mxu0 0
    %282 = vmatprep.subr.bf16.mxu0 0
    %283 = vmatpush1.bf16.msra.mxu0 0
    %284 = vmatprep.subr.bf16.mxu0 0
    %285 = vmatpush1.bf16.msra.mxu0 0
    %286 = vmatprep.mubr.bf16.mxu0 0
    %287 = vmatmul.mubr.bf16.gmra.mrb[0].mxu0 %v249
    %v288 = vpop.f32.mrb[0].mxu0
    %v289 = vadd.f32 %v210, %v288
    %v290 = vpop.f32.mrb[0].mxu0
    %v291 = vadd.f32 %v214, %v290
    %v292 = vpop.f32.mrb[0].mxu0
    %v293 = vadd.f32 %v210, %v292
    %v294 = vpop.f32.mrb[0].mxu0
    %v295 = vadd.f32 %v214, %v294
    %296 = vmatprep.mubr.bf16.mxu0 0
    %297 = vmatmul.mubr.bf16.gmra.mrb[0].mxu0 %v252
    %v298 = vpop.f32.mrb[0].mxu0
    %v299 = vadd.f32 %v210, %v298
    %v300 = vpop.f32.mrb[0].mxu0
    %v301 = vadd.f32 %v214, %v300
    %v302 = vpop.f32.mrb[0].mxu0
    %v303 = vadd.f32 %v210, %v302
    %v304 = vpop.f32.mrb[0].mxu0
    %v305 = vadd.f32 %v214, %v304
    %306 = vdwg.mxu0
    %v307 = vmax.f32 %v289, 0.0
    %v308 = vmax.f32 %v291, 0.0
    %v309 = vmax.f32 %v293, 0.0
    %v310 = vmax.f32 %v295, 0.0
    %v311 = vmax.f32 %v299, 0.0
    %v312 = vmax.f32 %v301, 0.0
    %v313 = vmax.f32 %v303, 0.0
    %v314 = vmax.f32 %v305, 0.0
    %v315 = vld [vmem:[#allocation4 + $0x60] sm:$0xf]
    %v316 = vld [vmem:[#allocation4 + $0x70] sm:$0xf]
    %v317 = vld [vmem:[#allocation4 + $0x80] sm:$0xf]
    %v318 = vld [vmem:[#allocation4 + $0x90] sm:$0xf]
    %v319 = vpack.c.bf16 %v309, %v307
    %v320 = vpack.c.bf16 %v310, %v308
    %v321 = vpack.c.bf16 %v313, %v311
    %v322 = vpack.c.bf16 %v314, %v312
    %v327 = vunpack.c.l.b16 %v315
    %v328 = vunpack.c.l.b16 %v316
    %v329 = vunpack.c.l.b16 %v317
    %v330 = vunpack.c.l.b16 %v318
    %v331 = vpack.c.b16 %v328, %v327
    %v332 = vpack.c.b16 %v330, %v329
    %v334 = vsel %vm192, %v331, 0
    %v337 = vsel %vm192, %v332, 0
    %339 = vmatprep.subr.bf16.mxu0 %v320
    %340 = vmatpush1.bf16.msra.mxu0 %v319
    %341 = vmatprep.subr.bf16.mxu0 %v322
    %342 = vmatpush1.bf16.msra.mxu0 %v321
    %343 = vmatprep.subr.bf16.mxu0 0
    %344 = vmatpush1.bf16.msra.mxu0 0
    %345 = vmatprep.subr.bf16.mxu0 0
    %346 = vmatpush1.bf16.msra.mxu0 0
    %347 = vmatprep.subr.bf16.mxu0 0
    %348 = vmatpush1.bf16.msra.mxu0 0
    %349 = vmatprep.subr.bf16.mxu0 0
    %350 = vmatpush1.bf16.msra.mxu0 0
    %351 = vmatprep.subr.bf16.mxu0 0
    %352 = vmatpush1.bf16.msra.mxu0 0
    %353 = vmatprep.subr.bf16.mxu0 0
    %354 = vmatpush1.bf16.msra.mxu0 0
    %355 = vmatprep.subr.bf16.mxu0 0
    %356 = vmatpush1.bf16.msra.mxu0 0
    %357 = vmatprep.subr.bf16.mxu0 0
    %358 = vmatpush1.bf16.msra.mxu0 0
    %359 = vmatprep.subr.bf16.mxu0 0
    %360 = vmatpush1.bf16.msra.mxu0 0
    %361 = vmatprep.subr.bf16.mxu0 0
    %362 = vmatpush1.bf16.msra.mxu0 0
    %363 = vmatprep.subr.bf16.mxu0 0
    %364 = vmatpush1.bf16.msra.mxu0 0
    %365 = vmatprep.subr.bf16.mxu0 0
    %366 = vmatpush1.bf16.msra.mxu0 0
    %367 = vmatprep.subr.bf16.mxu0 0
    %368 = vmatpush1.bf16.msra.mxu0 0
    %369 = vmatprep.subr.bf16.mxu0 0
    %370 = vmatpush1.bf16.msra.mxu0 0
    %371 = vmatprep.mubr.bf16.mxu0 0
    %372 = vmatmul.mubr.bf16.gmra.mrb[0].mxu0 %v334
    %v373 = vpop.f32.mrb[0].mxu0
    %v374 = vadd.f32 0.0, %v373
    %v375 = vpop.f32.mrb[0].mxu0
    %v376 = vadd.f32 0.0, %v375
    %v377 = vpop.f32.mrb[0].mxu0
    %v378 = vadd.f32 0.0, %v377
    %v379 = vpop.f32.mrb[0].mxu0
    %v380 = vadd.f32 0.0, %v379
    %381 = vmatprep.mubr.bf16.mxu0 0
    %382 = vmatmul.mubr.bf16.gmra.mrb[0].mxu0 %v337
    %v383 = vpop.f32.mrb[0].mxu0
    %v384 = vadd.f32 0.0, %v383
    %v385 = vpop.f32.mrb[0].mxu0
    %v386 = vadd.f32 0.0, %v385
    %v387 = vpop.f32.mrb[0].mxu0
    %v388 = vadd.f32 0.0, %v387
    %v389 = vpop.f32.mrb[0].mxu0
    %v390 = vadd.f32 0.0, %v389
    %391 = vdwg.mxu0
    %v392 = vmax.f32 %v374, %v384
    %v393 = vmax.f32 %v376, %v386
    %v394 = vmax.f32 %v378, %v388
    %v395 = vmax.f32 %v380, %v390
    %v396 = vld [vmem:[#allocation4 + $0xa0] sm:$0xff]
    %v397 = vld [vmem:[#allocation4 + $0xb0] sm:$0xff]
    %v398 = vld [vmem:[#allocation4 + $0xc0] sm:$0xff]
    %v399 = vld [vmem:[#allocation4 + $0xd0] sm:$0xff]
    %v400 = vld [vmem:[#allocation4 + $0xe0] sm:$0xff]
    %v401 = vld [vmem:[#allocation4 + $0xf0] sm:$0xff]
    %v402 = vld [vmem:[#allocation4 + $0x100] sm:$0xff]
    %v403 = vld [vmem:[#allocation4 + $0x110] sm:$0xff]
    %v404 = vld [vmem:[#allocation4 + $0x120] sm:$0xff]
    %v405 = vld [vmem:[#allocation4 + $0x130] sm:$0xff]
    %v406 = vld [vmem:[#allocation4 + $0x140] sm:$0xff]
    %v407 = vld [vmem:[#allocation4 + $0x150] sm:$0xff]
    %v408 = vld [vmem:[#allocation4 + $0x160] sm:$0xff]
    %v409 = vld [vmem:[#allocation4 + $0x170] sm:$0xff]
    %v410 = vld [vmem:[#allocation4 + $0x180] sm:$0xff]
    %v411 = vld [vmem:[#allocation4 + $0x190] sm:$0xff]
    %v412 = vld [vmem:[#allocation4 + $0x1a0] sm:$0xff]
    %v413 = vld [vmem:[#allocation4 + $0x1b0] sm:$0xff]
    %v414 = vld [vmem:[#allocation4 + $0x1c0] sm:$0xff]
    %v415 = vld [vmem:[#allocation4 + $0x1d0] sm:$0xff]
    %v416 = vld [vmem:[#allocation4 + $0x1e0] sm:$0xff]
    %v417 = vld [vmem:[#allocation4 + $0x1f0] sm:$0xff]
    %v418 = vld [vmem:[#allocation4 + $0x200] sm:$0xff]
    %v419 = vld [vmem:[#allocation4 + $0x210] sm:$0xff]
    %v420 = vld [vmem:[#allocation4 + $0x220] sm:$0xff]
    %v421 = vld [vmem:[#allocation4 + $0x230] sm:$0xff]
    %v422 = vld [vmem:[#allocation4 + $0x240] sm:$0xff]
    %v423 = vld [vmem:[#allocation4 + $0x250] sm:$0xff]
    %v424 = vld [vmem:[#allocation4 + $0x260] sm:$0xff]
    %v425 = vld [vmem:[#allocation4 + $0x270] sm:$0xff]
    %v426 = vld [vmem:[#allocation4 + $0x280] sm:$0xff]
    %v427 = vld [vmem:[#allocation4 + $0x290] sm:$0xff]
    %v428 = vpack.c.bf16 %v394, %v392
    %v429 = vpack.c.bf16 %v395, %v393
    %v462 = vunpack.c.l.b16 %v396
    %v463 = vunpack.c.h.b16 %v396
    %v464 = vunpack.c.l.b16 %v397
    %v465 = vunpack.c.h.b16 %v397
    %v466 = vunpack.c.l.b16 %v398
    %v467 = vunpack.c.h.b16 %v398
    %v468 = vunpack.c.l.b16 %v399
    %v469 = vunpack.c.h.b16 %v399
    %v470 = vunpack.c.l.b16 %v400
    %v471 = vunpack.c.h.b16 %v400
    %v472 = vunpack.c.l.b16 %v401
    %v473 = vunpack.c.h.b16 %v401
    %v474 = vunpack.c.l.b16 %v402
    %v475 = vunpack.c.h.b16 %v402
    %v476 = vunpack.c.l.b16 %v403
    %v477 = vunpack.c.h.b16 %v403
    %v478 = vunpack.c.l.b16 %v404
    %v479 = vunpack.c.h.b16 %v404
    %v480 = vunpack.c.l.b16 %v405
    %v481 = vunpack.c.h.b16 %v405
    %v482 = vunpack.c.l.b16 %v406
    %v483 = vunpack.c.h.b16 %v406
    %v484 = vunpack.c.l.b16 %v407
    %v485 = vunpack.c.h.b16 %v407
    %v486 = vunpack.c.l.b16 %v408
    %v487 = vunpack.c.h.b16 %v408
    %v488 = vunpack.c.l.b16 %v409
    %v489 = vunpack.c.h.b16 %v409
    %v490 = vunpack.c.l.b16 %v410
    %v491 = vunpack.c.h.b16 %v410
    %v492 = vunpack.c.l.b16 %v411
    %v493 = vunpack.c.h.b16 %v411
    %v494 = vunpack.c.l.b16 %v412
    %v495 = vunpack.c.h.b16 %v412
    %v496 = vunpack.c.l.b16 %v413
    %v497 = vunpack.c.h.b16 %v413
    %v498 = vunpack.c.l.b16 %v414
    %v499 = vunpack.c.h.b16 %v414
    %v500 = vunpack.c.l.b16 %v415
    %v501 = vunpack.c.h.b16 %v415
    %v502 = vunpack.c.l.b16 %v416
    %v503 = vunpack.c.h.b16 %v416
    %v504 = vunpack.c.l.b16 %v417
    %v505 = vunpack.c.h.b16 %v417
    %v506 = vunpack.c.l.b16 %v418
    %v507 = vunpack.c.h.b16 %v418
    %v508 = vunpack.c.l.b16 %v419
    %v509 = vunpack.c.h.b16 %v419
    %v510 = vunpack.c.l.b16 %v420
    %v511 = vunpack.c.h.b16 %v420
    %v512 = vunpack.c.l.b16 %v421
    %v513 = vunpack.c.h.b16 %v421
    %v514 = vunpack.c.l.b16 %v422
    %v515 = vunpack.c.h.b16 %v422
    %v516 = vunpack.c.l.b16 %v423
    %v517 = vunpack.c.h.b16 %v423
    %v518 = vunpack.c.l.b16 %v424
    %v519 = vunpack.c.h.b16 %v424
    %v520 = vunpack.c.l.b16 %v425
    %v521 = vunpack.c.h.b16 %v425
    %v522 = vunpack.c.l.b16 %v426
    %v523 = vunpack.c.h.b16 %v426
    %v524 = vunpack.c.l.b16 %v427
    %v525 = vunpack.c.h.b16 %v427
    %v526 = vpack.c.b16 %v464, %v462
    %v527 = vpack.c.b16 %v465, %v463
    %v528 = vpack.c.b16 %v468, %v466
    %v529 = vpack.c.b16 %v469, %v467
    %v530 = vpack.c.b16 %v472, %v470
    %v531 = vpack.c.b16 %v473, %v471
    %v532 = vpack.c.b16 %v476, %v474
    %v533 = vpack.c.b16 %v477, %v475
    %v534 = vpack.c.b16 %v480, %v478
    %v535 = vpack.c.b16 %v481, %v479
    %v536 = vpack.c.b16 %v484, %v482
    %v537 = vpack.c.b16 %v485, %v483
    %v538 = vpack.c.b16 %v488, %v486
    %v539 = vpack.c.b16 %v489, %v487
    %v540 = vpack.c.b16 %v492, %v490
    %v541 = vpack.c.b16 %v493, %v491
    %v542 = vpack.c.b16 %v496, %v494
    %v543 = vpack.c.b16 %v497, %v495
    %v544 = vpack.c.b16 %v500, %v498
    %v545 = vpack.c.b16 %v501, %v499
    %v546 = vpack.c.b16 %v504, %v502
    %v547 = vpack.c.b16 %v505, %v503
    %v548 = vpack.c.b16 %v508, %v506
    %v549 = vpack.c.b16 %v509, %v507
    %v550 = vpack.c.b16 %v512, %v510
    %v551 = vpack.c.b16 %v513, %v511
    %v552 = vpack.c.b16 %v516, %v514
    %v553 = vpack.c.b16 %v517, %v515
    %v554 = vpack.c.b16 %v520, %v518
    %v555 = vpack.c.b16 %v521, %v519
    %v556 = vpack.c.b16 %v524, %v522
    %v557 = vpack.c.b16 %v525, %v523
    %590 = vmatprep.subr.bf16.mxu0 %v527
    %591 = vmatpush1.bf16.msra.mxu0 %v526
    %592 = vmatprep.subr.bf16.mxu0 %v529
    %593 = vmatpush1.bf16.msra.mxu0 %v528
    %594 = vmatprep.subr.bf16.mxu0 %v531
    %595 = vmatpush1.bf16.msra.mxu0 %v530
    %596 = vmatprep.subr.bf16.mxu0 %v533
    %597 = vmatpush1.bf16.msra.mxu0 %v532
    %598 = vmatprep.subr.bf16.mxu0 %v535
    %599 = vmatpush1.bf16.msra.mxu0 %v534
    %600 = vmatprep.subr.bf16.mxu0 %v537
    %601 = vmatpush1.bf16.msra.mxu0 %v536
    %602 = vmatprep.subr.bf16.mxu0 %v539
    %603 = vmatpush1.bf16.msra.mxu0 %v538
    %604 = vmatprep.subr.bf16.mxu0 %v541
    %605 = vmatpush1.bf16.msra.mxu0 %v540
    %606 = vmatprep.subr.bf16.mxu0 %v543
    %607 = vmatpush1.bf16.msra.mxu0 %v542
    %608 = vmatprep.subr.bf16.mxu0 %v545
    %609 = vmatpush1.bf16.msra.mxu0 %v544
    %610 = vmatprep.subr.bf16.mxu0 %v547
    %611 = vmatpush1.bf16.msra.mxu0 %v546
    %612 = vmatprep.subr.bf16.mxu0 %v549
    %613 = vmatpush1.bf16.msra.mxu0 %v548
    %614 = vmatprep.subr.bf16.mxu0 %v551
    %615 = vmatpush1.bf16.msra.mxu0 %v550
    %616 = vmatprep.subr.bf16.mxu0 %v553
    %617 = vmatpush1.bf16.msra.mxu0 %v552
    %618 = vmatprep.subr.bf16.mxu0 %v555
    %619 = vmatpush1.bf16.msra.mxu0 %v554
    %620 = vmatprep.subr.bf16.mxu0 %v557
    %621 = vmatpush1.bf16.msra.mxu0 %v556
    %622 = vmatprep.mubr.bf16.mxu0 %v429
    %623 = vmatmul.mubr.bf16.gmra.mrb[0].mxu0 %v428
    %v624 = vpop.f32.mrb[0].mxu0
    %v625 = vadd.f32 0.0, %v624
    %v626 = vpop.f32.mrb[0].mxu0
    %v627 = vadd.f32 0.0, %v626
    %v628 = vpop.f32.mrb[0].mxu0
    %v629 = vadd.f32 0.0, %v628
    %v630 = vpop.f32.mrb[0].mxu0
    %v631 = vadd.f32 0.0, %v630
    %632 = vdwg.mxu0
    %v633 = vmax.f32 %v625, %v627
    %v634 = vmax.f32 %v629, %v631
    %vm635 = vcmp.lt.s32.totalorder %v59, 0
    %v636 = vsub.s32 0, %v59
    %v637 = vsel %vm635, %v636, %v59
    %v638 = vshrl.u32 %v637, 3
    %v639 = vand.u32 %v637, 7
    %v640 = vsub.s32 0, %v639
    %v641 = vsel %vm635, %v640, %v639
    %vm642 = vcmp.lt.s32.totalorder %v60, 0
    %v643 = vsub.s32 0, %v60
    %v644 = vsel %vm642, %v643, %v60
    %v645 = vshrl.u32 %v644, 3
    %v646 = vand.u32 %v644, 7
    %v647 = vsub.s32 0, %v646
    %v648 = vsel %vm642, %v647, %v646
    %vm649 = vcmp.ne.s32.totalorder %v641, 0
    %vm650 = vcmp.ne.s32.totalorder %v648, 0
    %vm651 = vcmp.lt.s32.totalorder %v641, 0
    %vm652 = vcmp.lt.s32.totalorder %v648, 0
    %vm653 = vmand %vm651, %vm649
    %vm654 = vmand %vm652, %vm650
    %v655 = vadd.s32 %v641, 8
    %v656 = vadd.s32 %v648, 8
    %v657 = vsel %vm653, %v655, %v641
    %v658 = vsel %vm654, %v656, %v648
    %vm659 = vcmp.eq.s32.totalorder %v657, 0
    %vm660 = vcmp.eq.s32.totalorder %v658, 0
    %v662 = vrot.slane %v634, 7
    %v665 = vrot.slane %v633, 7
    %v666 = vsel %vm121, %v665, %v662
    %v669 = vsel %vm121, %v662, %v665
    %v670 = vsel %vm659, 0.0, %v669
    %v671 = vsel %vm660, 0.0, %v666
    %vm672 = vcmp.eq.s32.totalorder %v657, 7
    %vm673 = vcmp.eq.s32.totalorder %v658, 7
    %v674 = vrot.slane %v633, 1
    %v675 = vrot.slane %v634, 1
    %v676 = vsel %vm141, %v674, %v675
    %v680 = vsel %vm141, %v675, %v674
    %v681 = vsel %vm672, 0.0, %v676
    %v682 = vsel %vm673, 0.0, %v680
    %v683 = vld [vmem:[#allocation4 + $0x2a0] sm:$0xff]
    %v684 = vld [vmem:[#allocation4 + $0x2b0] sm:$0xff]
    %v685 = vld [vmem:[#allocation4 + $0x2c0] sm:$0xff]
    %v686 = vld [vmem:[#allocation4 + $0x2d0] sm:$0xff]
    %v687 = vld [vmem:[#allocation4 + $0x2e0] sm:$0xff]
    %v688 = vld [vmem:[#allocation4 + $0x2f0] sm:$0xff]
    %v689 = vld [vmem:[#allocation4 + $0x300] sm:$0xff]
    %v690 = vld [vmem:[#allocation4 + $0x310] sm:$0xff]
    %v691 = vld [vmem:[#allocation4 + $0x320] sm:$0xff]
    %v692 = vld [vmem:[#allocation4 + $0x330] sm:$0xff]
    %v693 = vld [vmem:[#allocation4 + $0x340] sm:$0xff]
    %v694 = vld [vmem:[#allocation4 + $0x350] sm:$0xff]
    %v695 = vld [vmem:[#allocation4 + $0x360] sm:$0xff]
    %v696 = vld [vmem:[#allocation4 + $0x370] sm:$0xff]
    %v697 = vld [vmem:[#allocation4 + $0x380] sm:$0xff]
    %v698 = vld [vmem:[#allocation4 + $0x390] sm:$0xff]
    %v699 = vld [vmem:[#allocation4 + $0x3a0] sm:$0xff]
    %v700 = vld [vmem:[#allocation4 + $0x3b0] sm:$0xff]
    %v701 = vld [vmem:[#allocation4 + $0x3c0] sm:$0xff]
    %v702 = vld [vmem:[#allocation4 + $0x3d0] sm:$0xff]
    %v703 = vld [vmem:[#allocation4 + $0x3e0] sm:$0xff]
    %v704 = vld [vmem:[#allocation4 + $0x3f0] sm:$0xff]
    %v705 = vld [vmem:[#allocation4 + $0x400] sm:$0xff]
    %v706 = vld [vmem:[#allocation4 + $0x410] sm:$0xff]
    %v707 = vld [vmem:[#allocation4 + $0x420] sm:$0xff]
    %v708 = vld [vmem:[#allocation4 + $0x430] sm:$0xff]
    %v709 = vld [vmem:[#allocation4 + $0x440] sm:$0xff]
    %v710 = vld [vmem:[#allocation4 + $0x450] sm:$0xff]
    %v711 = vld [vmem:[#allocation4 + $0x460] sm:$0xff]
    %v712 = vld [vmem:[#allocation4 + $0x470] sm:$0xff]
    %v713 = vld [vmem:[#allocation4 + $0x480] sm:$0xff]
    %v714 = vld [vmem:[#allocation4 + $0x490] sm:$0xff]
    %v715 = vld [vmem:[#allocation4 + $0x4a0] sm:$0xff]
    %v716 = vld [vmem:[#allocation4 + $0x4b0] sm:$0xff]
    %v717 = vld [vmem:[#allocation4 + $0x4c0] sm:$0xff]
    %v718 = vld [vmem:[#allocation4 + $0x4d0] sm:$0xff]
    %v719 = vld [vmem:[#allocation4 + $0x4e0] sm:$0xff]
    %v720 = vld [vmem:[#allocation4 + $0x4f0] sm:$0xff]
    %v721 = vld [vmem:[#allocation4 + $0x500] sm:$0xff]
    %v722 = vld [vmem:[#allocation4 + $0x510] sm:$0xff]
    %v723 = vld [vmem:[#allocation4 + $0x520] sm:$0xff]
    %v724 = vld [vmem:[#allocation4 + $0x530] sm:$0xff]
    %v725 = vld [vmem:[#allocation4 + $0x540] sm:$0xff]
    %v726 = vld [vmem:[#allocation4 + $0x550] sm:$0xff]
    %v727 = vld [vmem:[#allocation4 + $0x560] sm:$0xff]
    %v728 = vld [vmem:[#allocation4 + $0x570] sm:$0xff]
    %v729 = vld [vmem:[#allocation4 + $0x580] sm:$0xff]
    %v730 = vld [vmem:[#allocation4 + $0x590] sm:$0xff]
    %v731 = vpack.c.bf16 %v671, %v670
    %v732 = vpack.c.bf16 %v634, %v633
    %v733 = vpack.c.bf16 %v682, %v681
    %s734 = scalar_lea.vmem [#allocation6], 1
    %v735 = vld [vmem:[%s734] ss:$8 sm:$0x3]
    %v737 = vlaneseq
    %v738 = vshrl.u32 %v737, 7
    %v739 = vsub.s32 0, %v738
    %v740 = vrot.slane %v735, %v739
    %v741 = vlaneseq
    %v742 = vshrl.u32 %v741, 7
    %v743 = vsub.s32 1, %v742
    %v744 = vrot.slane %v735, %v743
    %v795 = vunpack.c.l.b16 %v683
    %v796 = vunpack.c.h.b16 %v683
    %v797 = vunpack.c.l.b16 %v684
    %v798 = vunpack.c.h.b16 %v684
    %v799 = vunpack.c.l.b16 %v685
    %v800 = vunpack.c.h.b16 %v685
    %v801 = vunpack.c.l.b16 %v686
    %v802 = vunpack.c.h.b16 %v686
    %v803 = vunpack.c.l.b16 %v687
    %v804 = vunpack.c.h.b16 %v687
    %v805 = vunpack.c.l.b16 %v688
    %v806 = vunpack.c.h.b16 %v688
    %v807 = vunpack.c.l.b16 %v689
    %v808 = vunpack.c.h.b16 %v689
    %v809 = vunpack.c.l.b16 %v690
    %v810 = vunpack.c.h.b16 %v690
    %v811 = vunpack.c.l.b16 %v691
    %v812 = vunpack.c.h.b16 %v691
    %v813 = vunpack.c.l.b16 %v692
    %v814 = vunpack.c.h.b16 %v692
    %v815 = vunpack.c.l.b16 %v693
    %v816 = vunpack.c.h.b16 %v693
    %v817 = vunpack.c.l.b16 %v694
    %v818 = vunpack.c.h.b16 %v694
    %v819 = vunpack.c.l.b16 %v695
    %v820 = vunpack.c.h.b16 %v695
    %v821 = vunpack.c.l.b16 %v696
    %v822 = vunpack.c.h.b16 %v696
    %v823 = vunpack.c.l.b16 %v697
    %v824 = vunpack.c.h.b16 %v697
    %v825 = vunpack.c.l.b16 %v698
    %v826 = vunpack.c.h.b16 %v698
    %v827 = vunpack.c.l.b16 %v699
    %v828 = vunpack.c.h.b16 %v699
    %v829 = vunpack.c.l.b16 %v700
    %v830 = vunpack.c.h.b16 %v700
    %v831 = vunpack.c.l.b16 %v701
    %v832 = vunpack.c.h.b16 %v701
    %v833 = vunpack.c.l.b16 %v702
    %v834 = vunpack.c.h.b16 %v702
    %v835 = vunpack.c.l.b16 %v703
    %v836 = vunpack.c.h.b16 %v703
    %v837 = vunpack.c.l.b16 %v704
    %v838 = vunpack.c.h.b16 %v704
    %v839 = vunpack.c.l.b16 %v705
    %v840 = vunpack.c.h.b16 %v705
    %v841 = vunpack.c.l.b16 %v706
    %v842 = vunpack.c.h.b16 %v706
    %v843 = vunpack.c.l.b16 %v707
    %v844 = vunpack.c.h.b16 %v707
    %v845 = vunpack.c.l.b16 %v708
    %v846 = vunpack.c.h.b16 %v708
    %v847 = vunpack.c.l.b16 %v709
    %v848 = vunpack.c.h.b16 %v709
    %v849 = vunpack.c.l.b16 %v710
    %v850 = vunpack.c.h.b16 %v710
    %v851 = vunpack.c.l.b16 %v711
    %v852 = vunpack.c.h.b16 %v711
    %v853 = vunpack.c.l.b16 %v712
    %v854 = vunpack.c.h.b16 %v712
    %v855 = vunpack.c.l.b16 %v713
    %v856 = vunpack.c.h.b16 %v713
    %v857 = vunpack.c.l.b16 %v714
    %v858 = vunpack.c.h.b16 %v714
    %v859 = vunpack.c.l.b16 %v715
    %v860 = vunpack.c.h.b16 %v715
    %v861 = vunpack.c.l.b16 %v716
    %v862 = vunpack.c.h.b16 %v716
    %v863 = vunpack.c.l.b16 %v717
    %v864 = vunpack.c.h.b16 %v717
    %v865 = vunpack.c.l.b16 %v718
    %v866 = vunpack.c.h.b16 %v718
    %v867 = vunpack.c.l.b16 %v719
    %v868 = vunpack.c.h.b16 %v719
    %v869 = vunpack.c.l.b16 %v720
    %v870 = vunpack.c.h.b16 %v720
    %v871 = vunpack.c.l.b16 %v721
    %v872 = vunpack.c.h.b16 %v721
    %v873 = vunpack.c.l.b16 %v722
    %v874 = vunpack.c.h.b16 %v722
    %v875 = vunpack.c.l.b16 %v723
    %v876 = vunpack.c.h.b16 %v723
    %v877 = vunpack.c.l.b16 %v724
    %v878 = vunpack.c.h.b16 %v724
    %v879 = vunpack.c.l.b16 %v725
    %v880 = vunpack.c.h.b16 %v725
    %v881 = vunpack.c.l.b16 %v726
    %v882 = vunpack.c.h.b16 %v726
    %v883 = vunpack.c.l.b16 %v727
    %v884 = vunpack.c.h.b16 %v727
    %v885 = vunpack.c.l.b16 %v728
    %v886 = vunpack.c.h.b16 %v728
    %v887 = vunpack.c.l.b16 %v729
    %v888 = vunpack.c.h.b16 %v729
    %v889 = vunpack.c.l.b16 %v730
    %v890 = vunpack.c.h.b16 %v730
    %v891 = vpack.c.b16 %v797, %v795
    %v892 = vpack.c.b16 %v798, %v796
    %v893 = vpack.c.b16 %v801, %v799
    %v894 = vpack.c.b16 %v802, %v800
    %v895 = vpack.c.b16 %v805, %v803
    %v896 = vpack.c.b16 %v806, %v804
    %v897 = vpack.c.b16 %v809, %v807
    %v898 = vpack.c.b16 %v810, %v808
    %v899 = vpack.c.b16 %v813, %v811
    %v900 = vpack.c.b16 %v814, %v812
    %v901 = vpack.c.b16 %v817, %v815
    %v902 = vpack.c.b16 %v818, %v816
    %v903 = vpack.c.b16 %v821, %v819
    %v904 = vpack.c.b16 %v822, %v820
    %v905 = vpack.c.b16 %v825, %v823
    %v906 = vpack.c.b16 %v826, %v824
    %v907 = vpack.c.b16 %v829, %v827
    %v908 = vpack.c.b16 %v830, %v828
    %v909 = vpack.c.b16 %v833, %v831
    %v910 = vpack.c.b16 %v834, %v832
    %v911 = vpack.c.b16 %v837, %v835
    %v912 = vpack.c.b16 %v838, %v836
    %v913 = vpack.c.b16 %v841, %v839
    %v914 = vpack.c.b16 %v842, %v840
    %v915 = vpack.c.b16 %v845, %v843
    %v916 = vpack.c.b16 %v846, %v844
    %v917 = vpack.c.b16 %v849, %v847
    %v918 = vpack.c.b16 %v850, %v848
    %v919 = vpack.c.b16 %v853, %v851
    %v920 = vpack.c.b16 %v854, %v852
    %v921 = vpack.c.b16 %v857, %v855
    %v922 = vpack.c.b16 %v858, %v856
    %v923 = vpack.c.b16 %v861, %v859
    %v924 = vpack.c.b16 %v862, %v860
    %v925 = vpack.c.b16 %v865, %v863
    %v926 = vpack.c.b16 %v866, %v864
    %v927 = vpack.c.b16 %v869, %v867
    %v928 = vpack.c.b16 %v870, %v868
    %v929 = vpack.c.b16 %v873, %v871
    %v930 = vpack.c.b16 %v874, %v872
    %v931 = vpack.c.b16 %v877, %v875
    %v932 = vpack.c.b16 %v878, %v876
    %v933 = vpack.c.b16 %v881, %v879
    %v934 = vpack.c.b16 %v882, %v880
    %v935 = vpack.c.b16 %v885, %v883
    %v936 = vpack.c.b16 %v886, %v884
    %v937 = vpack.c.b16 %v889, %v887
    %v938 = vpack.c.b16 %v890, %v888
    %987 = vmatprep.subr.bf16.mxu0 %v892
    %988 = vmatpush1.bf16.msra.mxu0 %v891
    %989 = vmatprep.subr.bf16.mxu0 %v894
    %990 = vmatpush1.bf16.msra.mxu0 %v893
    %991 = vmatprep.subr.bf16.mxu0 %v896
    %992 = vmatpush1.bf16.msra.mxu0 %v895
    %993 = vmatprep.subr.bf16.mxu0 %v898
    %994 = vmatpush1.bf16.msra.mxu0 %v897
    %995 = vmatprep.subr.bf16.mxu0 %v900
    %996 = vmatpush1.bf16.msra.mxu0 %v899
    %997 = vmatprep.subr.bf16.mxu0 %v902
    %998 = vmatpush1.bf16.msra.mxu0 %v901
    %999 = vmatprep.subr.bf16.mxu0 %v904
    %1000 = vmatpush1.bf16.msra.mxu0 %v903
    %1001 = vmatprep.subr.bf16.mxu0 %v906
    %1002 = vmatpush1.bf16.msra.mxu0 %v905
    %1003 = vmatprep.subr.bf16.mxu0 %v908
    %1004 = vmatpush1.bf16.msra.mxu0 %v907
    %1005 = vmatprep.subr.bf16.mxu0 %v910
    %1006 = vmatpush1.bf16.msra.mxu0 %v909
    %1007 = vmatprep.subr.bf16.mxu0 %v912
    %1008 = vmatpush1.bf16.msra.mxu0 %v911
    %1009 = vmatprep.subr.bf16.mxu0 %v914
    %1010 = vmatpush1.bf16.msra.mxu0 %v913
    %1011 = vmatprep.subr.bf16.mxu0 %v916
    %1012 = vmatpush1.bf16.msra.mxu0 %v915
    %1013 = vmatprep.subr.bf16.mxu0 %v918
    %1014 = vmatpush1.bf16.msra.mxu0 %v917
    %1015 = vmatprep.subr.bf16.mxu0 %v920
    %1016 = vmatpush1.bf16.msra.mxu0 %v919
    %1017 = vmatprep.subr.bf16.mxu0 %v922
    %1018 = vmatpush1.bf16.msra.mxu0 %v921
    %1019 = vmatprep.mubr.bf16.mxu0 %v732
    %1020 = vmatmul.mubr.bf16.gmra.mrb[0].mxu0 %v731
    %v1021 = vpop.f32.mrb[0].mxu0
    %v1022 = vadd.f32 %v740, %v1021
    %v1023 = vpop.f32.mrb[0].mxu0
    %v1024 = vadd.f32 %v744, %v1023
    %v1025 = vpop.f32.mrb[0].mxu0
    %v1026 = vadd.f32 %v740, %v1025
    %v1027 = vpop.f32.mrb[0].mxu0
    %v1028 = vadd.f32 %v744, %v1027
    %1029 = vdwg.mxu0
    %1030 = vmatprep.subr.bf16.mxu0 %v924
    %1031 = vmatpush1.bf16.msra.mxu0 %v923
    %1032 = vmatprep.subr.bf16.mxu0 %v926
    %1033 = vmatpush1.bf16.msra.mxu0 %v925
    %1034 = vmatprep.subr.bf16.mxu0 %v928
    %1035 = vmatpush1.bf16.msra.mxu0 %v927
    %1036 = vmatprep.subr.bf16.mxu0 %v930
    %1037 = vmatpush1.bf16.msra.mxu0 %v929
    %1038 = vmatprep.subr.bf16.mxu0 %v932
    %1039 = vmatpush1.bf16.msra.mxu0 %v931
    %1040 = vmatprep.subr.bf16.mxu0 %v934
    %1041 = vmatpush1.bf16.msra.mxu0 %v933
    %1042 = vmatprep.subr.bf16.mxu0 %v936
    %1043 = vmatpush1.bf16.msra.mxu0 %v935
    %1044 = vmatprep.subr.bf16.mxu0 %v938
    %1045 = vmatpush1.bf16.msra.mxu0 %v937
    %1046 = vmatprep.subr.bf16.mxu0 0
    %1047 = vmatpush1.bf16.msra.mxu0 0
    %1048 = vmatprep.subr.bf16.mxu0 0
    %1049 = vmatpush1.bf16.msra.mxu0 0
    %1050 = vmatprep.subr.bf16.mxu0 0
    %1051 = vmatpush1.bf16.msra.mxu0 0
    %1052 = vmatprep.subr.bf16.mxu0 0
    %1053 = vmatpush1.bf16.msra.mxu0 0
    %1054 = vmatprep.subr.bf16.mxu0 0
    %1055 = vmatpush1.bf16.msra.mxu0 0
    %1056 = vmatprep.subr.bf16.mxu0 0
    %1057 = vmatpush1.bf16.msra.mxu0 0
    %1058 = vmatprep.subr.bf16.mxu0 0
    %1059 = vmatpush1.bf16.msra.mxu0 0
    %1060 = vmatprep.subr.bf16.mxu0 0
    %1061 = vmatpush1.bf16.msra.mxu0 0
    %1062 = vmatprep.mubr.bf16.mxu0 0
    %1063 = vmatmul.mubr.bf16.gmra.mrb[0].mxu0 %v733
    %v1064 = vpop.f32.mrb[0].mxu0
    %v1065 = vadd.f32 %v1022, %v1064
    %v1066 = vpop.f32.mrb[0].mxu0
    %v1067 = vadd.f32 %v1024, %v1066
    %v1068 = vpop.f32.mrb[0].mxu0
    %v1069 = vadd.f32 %v1026, %v1068
    %v1070 = vpop.f32.mrb[0].mxu0
    %v1071 = vadd.f32 %v1028, %v1070
    %1072 = vdwg.mxu0
    %v1073 = vmax.f32 %v1065, 0.0
    %v1074 = vmax.f32 %v1067, 0.0
    %v1075 = vmax.f32 %v1069, 0.0
    %v1076 = vmax.f32 %v1071, 0.0
    %v1077 = vld [vmem:[#allocation4 + $0x5a0] sm:$0xf]
    %v1078 = vld [vmem:[#allocation4 + $0x5b0] sm:$0xf]
    %v1079 = vpack.c.bf16 %v1075, %v1073
    %v1080 = vpack.c.bf16 %v1076, %v1074
    %v1083 = vunpack.c.l.b16 %v1077
    %v1084 = vunpack.c.l.b16 %v1078
    %v1085 = vpack.c.b16 %v1084, %v1083
    %v1087 = vsel %vm187, %v1085, 0
    %1089 = vmatprep.subr.bf16.mxu0 %v1080
    %1090 = vmatpush1.bf16.msra.mxu0 %v1079
    %1091 = vmatprep.subr.bf16.mxu0 0
    %1092 = vmatpush1.bf16.msra.mxu0 0
    %1093 = vmatprep.subr.bf16.mxu0 0
    %1094 = vmatpush1.bf16.msra.mxu0 0
    %1095 = vmatprep.subr.bf16.mxu0 0
    %1096 = vmatpush1.bf16.msra.mxu0 0
    %1097 = vmatprep.subr.bf16.mxu0 0
    %1098 = vmatpush1.bf16.msra.mxu0 0
    %1099 = vmatprep.subr.bf16.mxu0 0
    %1100 = vmatpush1.bf16.msra.mxu0 0
    %1101 = vmatprep.subr.bf16.mxu0 0
    %1102 = vmatpush1.bf16.msra.mxu0 0
    %1103 = vmatprep.subr.bf16.mxu0 0
    %1104 = vmatpush1.bf16.msra.mxu0 0
    %1105 = vmatprep.subr.bf16.mxu0 0
    %1106 = vmatpush1.bf16.msra.mxu0 0
    %1107 = vmatprep.subr.bf16.mxu0 0
    %1108 = vmatpush1.bf16.msra.mxu0 0
    %1109 = vmatprep.subr.bf16.mxu0 0
    %1110 = vmatpush1.bf16.msra.mxu0 0
    %1111 = vmatprep.subr.bf16.mxu0 0
    %1112 = vmatpush1.bf16.msra.mxu0 0
    %1113 = vmatprep.subr.bf16.mxu0 0
    %1114 = vmatpush1.bf16.msra.mxu0 0
    %1115 = vmatprep.subr.bf16.mxu0 0
    %1116 = vmatpush1.bf16.msra.mxu0 0
    %1117 = vmatprep.subr.bf16.mxu0 0
    %1118 = vmatpush1.bf16.msra.mxu0 0
    %1119 = vmatprep.subr.bf16.mxu0 0
    %1120 = vmatpush1.bf16.msra.mxu0 0
    %1121 = vmatprep.mubr.bf16.mxu0 0
    %1122 = vmatmul.mubr.bf16.gmra.mrb[0].mxu0 %v1087
    %v1123 = vpop.f32.mrb[0].mxu0
    %v1124 = vadd.f32 0.0, %v1123
    %v1125 = vpop.f32.mrb[0].mxu0
    %v1126 = vadd.f32 0.0, %v1125
    %v1127 = vpop.f32.mrb[0].mxu0
    %v1128 = vadd.f32 0.0, %v1127
    %v1129 = vpop.f32.mrb[0].mxu0
    %v1130 = vadd.f32 0.0, %v1129
    %1131 = vdwg.mxu0
    %v1132 = vmax.f32 %v1124, %v1128
    %v1133 = vmax.f32 %v1126, %v1130
    %v1134 = vld [vmem:[#allocation4 + $0x5c0] sm:$0xff]
    %v1135 = vld [vmem:[#allocation4 + $0x5d0] sm:$0xff]
    %v1136 = vld [vmem:[#allocation4 + $0x5e0] sm:$0xff]
    %v1137 = vld [vmem:[#allocation4 + $0x5f0] sm:$0xff]
    %v1138 = vld [vmem:[#allocation4 + $0x600] sm:$0xff]
    %v1139 = vld [vmem:[#allocation4 + $0x610] sm:$0xff]
    %v1140 = vld [vmem:[#allocation4 + $0x620] sm:$0xff]
    %v1141 = vld [vmem:[#allocation4 + $0x630] sm:$0xff]
    %v1142 = vld [vmem:[#allocation4 + $0x640] sm:$0xff]
    %v1143 = vld [vmem:[#allocation4 + $0x650] sm:$0xff]
    %v1144 = vld [vmem:[#allocation4 + $0x660] sm:$0xff]
    %v1145 = vld [vmem:[#allocation4 + $0x670] sm:$0xff]
    %v1146 = vld [vmem:[#allocation4 + $0x680] sm:$0xff]
    %v1147 = vld [vmem:[#allocation4 + $0x690] sm:$0xff]
    %v1148 = vld [vmem:[#allocation4 + $0x6a0] sm:$0xff]
    %v1149 = vld [vmem:[#allocation4 + $0x6b0] sm:$0xff]
    %v1150 = vld [vmem:[#allocation4 + $0x6c0] sm:$0xff]
    %v1151 = vld [vmem:[#allocation4 + $0x6d0] sm:$0xff]
    %v1152 = vld [vmem:[#allocation4 + $0x6e0] sm:$0xff]
    %v1153 = vld [vmem:[#allocation4 + $0x6f0] sm:$0xff]
    %v1154 = vld [vmem:[#allocation4 + $0x700] sm:$0xff]
    %v1155 = vld [vmem:[#allocation4 + $0x710] sm:$0xff]
    %v1156 = vld [vmem:[#allocation4 + $0x720] sm:$0xff]
    %v1157 = vld [vmem:[#allocation4 + $0x730] sm:$0xff]
    %v1158 = vld [vmem:[#allocation4 + $0x740] sm:$0xff]
    %v1159 = vld [vmem:[#allocation4 + $0x750] sm:$0xff]
    %v1160 = vld [vmem:[#allocation4 + $0x760] sm:$0xff]
    %v1161 = vld [vmem:[#allocation4 + $0x770] sm:$0xff]
    %v1162 = vld [vmem:[#allocation4 + $0x780] sm:$0xff]
    %v1163 = vld [vmem:[#allocation4 + $0x790] sm:$0xff]
    %v1164 = vld [vmem:[#allocation4 + $0x7a0] sm:$0xff]
    %v1165 = vld [vmem:[#allocation4 + $0x7b0] sm:$0xff]
    %v1166 = vpack.c.bf16 %v1132, %v1132
    %v1167 = vpack.c.bf16 %v1133, %v1133
    %v1200 = vunpack.c.l.b16 %v1134
    %v1201 = vunpack.c.h.b16 %v1134
    %v1202 = vunpack.c.l.b16 %v1135
    %v1203 = vunpack.c.h.b16 %v1135
    %v1204 = vunpack.c.l.b16 %v1136
    %v1205 = vunpack.c.h.b16 %v1136
    %v1206 = vunpack.c.l.b16 %v1137
    %v1207 = vunpack.c.h.b16 %v1137
    %v1208 = vunpack.c.l.b16 %v1138
    %v1209 = vunpack.c.h.b16 %v1138
    %v1210 = vunpack.c.l.b16 %v1139
    %v1211 = vunpack.c.h.b16 %v1139
    %v1212 = vunpack.c.l.b16 %v1140
    %v1213 = vunpack.c.h.b16 %v1140
    %v1214 = vunpack.c.l.b16 %v1141
    %v1215 = vunpack.c.h.b16 %v1141
    %v1216 = vunpack.c.l.b16 %v1142
    %v1217 = vunpack.c.h.b16 %v1142
    %v1218 = vunpack.c.l.b16 %v1143
    %v1219 = vunpack.c.h.b16 %v1143
    %v1220 = vunpack.c.l.b16 %v1144
    %v1221 = vunpack.c.h.b16 %v1144
    %v1222 = vunpack.c.l.b16 %v1145
    %v1223 = vunpack.c.h.b16 %v1145
    %v1224 = vunpack.c.l.b16 %v1146
    %v1225 = vunpack.c.h.b16 %v1146
    %v1226 = vunpack.c.l.b16 %v1147
    %v1227 = vunpack.c.h.b16 %v1147
    %v1228 = vunpack.c.l.b16 %v1148
    %v1229 = vunpack.c.h.b16 %v1148
    %v1230 = vunpack.c.l.b16 %v1149
    %v1231 = vunpack.c.h.b16 %v1149
    %v1232 = vunpack.c.l.b16 %v1150
    %v1233 = vunpack.c.h.b16 %v1150
    %v1234 = vunpack.c.l.b16 %v1151
    %v1235 = vunpack.c.h.b16 %v1151
    %v1236 = vunpack.c.l.b16 %v1152
    %v1237 = vunpack.c.h.b16 %v1152
    %v1238 = vunpack.c.l.b16 %v1153
    %v1239 = vunpack.c.h.b16 %v1153
    %v1240 = vunpack.c.l.b16 %v1154
    %v1241 = vunpack.c.h.b16 %v1154
    %v1242 = vunpack.c.l.b16 %v1155
    %v1243 = vunpack.c.h.b16 %v1155
    %v1244 = vunpack.c.l.b16 %v1156
    %v1245 = vunpack.c.h.b16 %v1156
    %v1246 = vunpack.c.l.b16 %v1157
    %v1247 = vunpack.c.h.b16 %v1157
    %v1248 = vunpack.c.l.b16 %v1158
    %v1249 = vunpack.c.h.b16 %v1158
    %v1250 = vunpack.c.l.b16 %v1159
    %v1251 = vunpack.c.h.b16 %v1159
    %v1252 = vunpack.c.l.b16 %v1160
    %v1253 = vunpack.c.h.b16 %v1160
    %v1254 = vunpack.c.l.b16 %v1161
    %v1255 = vunpack.c.h.b16 %v1161
    %v1256 = vunpack.c.l.b16 %v1162
    %v1257 = vunpack.c.h.b16 %v1162
    %v1258 = vunpack.c.l.b16 %v1163
    %v1259 = vunpack.c.h.b16 %v1163
    %v1260 = vunpack.c.l.b16 %v1164
    %v1261 = vunpack.c.h.b16 %v1164
    %v1262 = vunpack.c.l.b16 %v1165
    %v1263 = vunpack.c.h.b16 %v1165
    %v1264 = vpack.c.b16 %v1202, %v1200
    %v1265 = vpack.c.b16 %v1203, %v1201
    %v1266 = vpack.c.b16 %v1206, %v1204
    %v1267 = vpack.c.b16 %v1207, %v1205
    %v1268 = vpack.c.b16 %v1210, %v1208
    %v1269 = vpack.c.b16 %v1211, %v1209
    %v1270 = vpack.c.b16 %v1214, %v1212
    %v1271 = vpack.c.b16 %v1215, %v1213
    %v1272 = vpack.c.b16 %v1218, %v1216
    %v1273 = vpack.c.b16 %v1219, %v1217
    %v1274 = vpack.c.b16 %v1222, %v1220
    %v1275 = vpack.c.b16 %v1223, %v1221
    %v1276 = vpack.c.b16 %v1226, %v1224
    %v1277 = vpack.c.b16 %v1227, %v1225
    %v1278 = vpack.c.b16 %v1230, %v1228
    %v1279 = vpack.c.b16 %v1231, %v1229
    %v1280 = vpack.c.b16 %v1234, %v1232
    %v1281 = vpack.c.b16 %v1235, %v1233
    %v1282 = vpack.c.b16 %v1238, %v1236
    %v1283 = vpack.c.b16 %v1239, %v1237
    %v1284 = vpack.c.b16 %v1242, %v1240
    %v1285 = vpack.c.b16 %v1243, %v1241
    %v1286 = vpack.c.b16 %v1246, %v1244
    %v1287 = vpack.c.b16 %v1247, %v1245
    %v1288 = vpack.c.b16 %v1250, %v1248
    %v1289 = vpack.c.b16 %v1251, %v1249
    %v1290 = vpack.c.b16 %v1254, %v1252
    %v1291 = vpack.c.b16 %v1255, %v1253
    %v1292 = vpack.c.b16 %v1258, %v1256
    %v1293 = vpack.c.b16 %v1259, %v1257
    %v1294 = vpack.c.b16 %v1262, %v1260
    %v1295 = vpack.c.b16 %v1263, %v1261
    %1328 = vmatprep.subr.bf16.mxu0 %v1265
    %1329 = vmatpush1.bf16.msra.mxu0 %v1264
    %1330 = vmatprep.subr.bf16.mxu0 %v1267
    %1331 = vmatpush1.bf16.msra.mxu0 %v1266
    %1332 = vmatprep.subr.bf16.mxu0 %v1269
    %1333 = vmatpush1.bf16.msra.mxu0 %v1268
    %1334 = vmatprep.subr.bf16.mxu0 %v1271
    %1335 = vmatpush1.bf16.msra.mxu0 %v1270
    %1336 = vmatprep.subr.bf16.mxu0 %v1273
    %1337 = vmatpush1.bf16.msra.mxu0 %v1272
    %1338 = vmatprep.subr.bf16.mxu0 %v1275
    %1339 = vmatpush1.bf16.msra.mxu0 %v1274
    %1340 = vmatprep.subr.bf16.mxu0 %v1277
    %1341 = vmatpush1.bf16.msra.mxu0 %v1276
    %1342 = vmatprep.subr.bf16.mxu0 %v1279
    %1343 = vmatpush1.bf16.msra.mxu0 %v1278
    %1344 = vmatprep.subr.bf16.mxu0 %v1281
    %1345 = vmatpush1.bf16.msra.mxu0 %v1280
    %1346 = vmatprep.subr.bf16.mxu0 %v1283
    %1347 = vmatpush1.bf16.msra.mxu0 %v1282
    %1348 = vmatprep.subr.bf16.mxu0 %v1285
    %1349 = vmatpush1.bf16.msra.mxu0 %v1284
    %1350 = vmatprep.subr.bf16.mxu0 %v1287
    %1351 = vmatpush1.bf16.msra.mxu0 %v1286
    %1352 = vmatprep.subr.bf16.mxu0 %v1289
    %1353 = vmatpush1.bf16.msra.mxu0 %v1288
    %1354 = vmatprep.subr.bf16.mxu0 %v1291
    %1355 = vmatpush1.bf16.msra.mxu0 %v1290
    %1356 = vmatprep.subr.bf16.mxu0 %v1293
    %1357 = vmatpush1.bf16.msra.mxu0 %v1292
    %1358 = vmatprep.subr.bf16.mxu0 %v1295
    %1359 = vmatpush1.bf16.msra.mxu0 %v1294
    %1360 = vmatprep.mubr.bf16.mxu0 %v1167
    %1361 = vmatmul.mubr.bf16.gmra.mrb[0].mxu0 %v1166
    %v1362 = vpop.f32.mrb[0].mxu0
    %v1363 = vadd.f32 0.0, %v1362
    %v1364 = vpop.f32.mrb[0].mxu0
    %v1365 = vadd.f32 0.0, %v1364
    %v1366 = vpop.f32.mrb[0].mxu0
    %v1367 = vpop.f32.mrb[0].mxu0
    %1368 = vdwg.mxu0
    %v1369 = vmax.f32 %v1363, %v1365
    %vm1370 = vcmp.lt.s32.totalorder %v59, 0
    %v1371 = vsub.s32 0, %v59
    %v1372 = vsel %vm1370, %v1371, %v59
    %v1373 = vshrl.u32 %v1372, 2
    %v1374 = vand.u32 %v1372, 3
    %v1375 = vsub.s32 0, %v1374
    %v1376 = vsel %vm1370, %v1375, %v1374
    %vm1377 = vcmp.ne.s32.totalorder %v1376, 0
    %vm1378 = vcmp.lt.s32.totalorder %v1376, 0
    %vm1379 = vmand %vm1378, %vm1377
    %v1380 = vadd.s32 %v1376, 4
    %v1381 = vsel %vm1379, %v1380, %v1376
    %vm1382 = vcmp.eq.s32.totalorder %v1381, 0
    %v1384 = vrot.slane %v1369, 7
    %v1386 = vsel %vm121, %v1384, %v1384
    %v1387 = vsel %vm1382, 0.0, %v1386
    %vm1388 = vcmp.eq.s32.totalorder %v1381, 3
    %v1389 = vrot.slane %v1369, 1
    %v1391 = vsel %vm141, %v1389, %v1389
    %v1392 = vsel %vm1388, 0.0, %v1391
    %v1393 = vld [vmem:[#allocation4 + $0x7c0] sm:$0xff]
    %v1394 = vld [vmem:[#allocation4 + $0x7d0] sm:$0xff]
    %v1395 = vld [vmem:[#allocation4 + $0x7e0] sm:$0xff]
    %v1396 = vld [vmem:[#allocation4 + $0x7f0] sm:$0xff]
    %v1397 = vld [vmem:[#allocation4 + $0x800] sm:$0xff]
    %v1398 = vld [vmem:[#allocation4 + $0x810] sm:$0xff]
    %v1399 = vld [vmem:[#allocation4 + $0x820] sm:$0xff]
    %v1400 = vld [vmem:[#allocation4 + $0x830] sm:$0xff]
    %v1401 = vld [vmem:[#allocation4 + $0x840] sm:$0xff]
    %v1402 = vld [vmem:[#allocation4 + $0x850] sm:$0xff]
    %v1403 = vld [vmem:[#allocation4 + $0x860] sm:$0xff]
    %v1404 = vld [vmem:[#allocation4 + $0x870] sm:$0xff]
    %v1405 = vld [vmem:[#allocation4 + $0x880] sm:$0xff]
    %v1406 = vld [vmem:[#allocation4 + $0x890] sm:$0xff]
    %v1407 = vld [vmem:[#allocation4 + $0x8a0] sm:$0xff]
    %v1408 = vld [vmem:[#allocation4 + $0x8b0] sm:$0xff]
    %v1409 = vld [vmem:[#allocation4 + $0x8c0] sm:$0xff]
    %v1410 = vld [vmem:[#allocation4 + $0x8d0] sm:$0xff]
    %v1411 = vld [vmem:[#allocation4 + $0x8e0] sm:$0xff]
    %v1412 = vld [vmem:[#allocation4 + $0x8f0] sm:$0xff]
    %v1413 = vld [vmem:[#allocation4 + $0x900] sm:$0xff]
    %v1414 = vld [vmem:[#allocation4 + $0x910] sm:$0xff]
    %v1415 = vld [vmem:[#allocation4 + $0x920] sm:$0xff]
    %v1416 = vld [vmem:[#allocation4 + $0x930] sm:$0xff]
    %v1417 = vld [vmem:[#allocation4 + $0x940] sm:$0xff]
    %v1418 = vld [vmem:[#allocation4 + $0x950] sm:$0xff]
    %v1419 = vld [vmem:[#allocation4 + $0x960] sm:$0xff]
    %v1420 = vld [vmem:[#allocation4 + $0x970] sm:$0xff]
    %v1421 = vld [vmem:[#allocation4 + $0x980] sm:$0xff]
    %v1422 = vld [vmem:[#allocation4 + $0x990] sm:$0xff]
    %v1423 = vld [vmem:[#allocation4 + $0x9a0] sm:$0xff]
    %v1424 = vld [vmem:[#allocation4 + $0x9b0] sm:$0xff]
    %v1425 = vld [vmem:[#allocation4 + $0x9c0] sm:$0xff]
    %v1426 = vld [vmem:[#allocation4 + $0x9d0] sm:$0xff]
    %v1427 = vld [vmem:[#allocation4 + $0x9e0] sm:$0xff]
    %v1428 = vld [vmem:[#allocation4 + $0x9f0] sm:$0xff]
    %v1429 = vld [vmem:[#allocation4 + $0xa00] sm:$0xff]
    %v1430 = vld [vmem:[#allocation4 + $0xa10] sm:$0xff]
    %v1431 = vld [vmem:[#allocation4 + $0xa20] sm:$0xff]
    %v1432 = vld [vmem:[#allocation4 + $0xa30] sm:$0xff]
    %v1433 = vld [vmem:[#allocation4 + $0xa40] sm:$0xff]
    %v1434 = vld [vmem:[#allocation4 + $0xa50] sm:$0xff]
    %v1435 = vld [vmem:[#allocation4 + $0xa60] sm:$0xff]
    %v1436 = vld [vmem:[#allocation4 + $0xa70] sm:$0xff]
    %v1437 = vld [vmem:[#allocation4 + $0xa80] sm:$0xff]
    %v1438 = vld [vmem:[#allocation4 + $0xa90] sm:$0xff]
    %v1439 = vld [vmem:[#allocation4 + $0xaa0] sm:$0xff]
    %v1440 = vld [vmem:[#allocation4 + $0xab0] sm:$0xff]
    %v1441 = vpack.c.bf16 %v1387, %v1387
    %v1442 = vpack.c.bf16 %v1369, %v1369
    %v1443 = vpack.c.bf16 %v1392, %v1392
    %s1444 = scalar_lea.vmem [#allocation6], 2
    %v1445 = vld [vmem:[%s1444] ss:$8 sm:$0x3]
    %v1447 = vlaneseq
    %v1448 = vshrl.u32 %v1447, 7
    %v1449 = vsub.s32 0, %v1448
    %v1450 = vrot.slane %v1445, %v1449
    %v1451 = vlaneseq
    %v1452 = vshrl.u32 %v1451, 7
    %v1453 = vsub.s32 1, %v1452
    %v1454 = vrot.slane %v1445, %v1453
    %v1505 = vunpack.c.l.b16 %v1393
    %v1506 = vunpack.c.h.b16 %v1393
    %v1507 = vunpack.c.l.b16 %v1394
    %v1508 = vunpack.c.h.b16 %v1394
    %v1509 = vunpack.c.l.b16 %v1395
    %v1510 = vunpack.c.h.b16 %v1395
    %v1511 = vunpack.c.l.b16 %v1396
    %v1512 = vunpack.c.h.b16 %v1396
    %v1513 = vunpack.c.l.b16 %v1397
    %v1514 = vunpack.c.h.b16 %v1397
    %v1515 = vunpack.c.l.b16 %v1398
    %v1516 = vunpack.c.h.b16 %v1398
    %v1517 = vunpack.c.l.b16 %v1399
    %v1518 = vunpack.c.h.b16 %v1399
    %v1519 = vunpack.c.l.b16 %v1400
    %v1520 = vunpack.c.h.b16 %v1400
    %v1521 = vunpack.c.l.b16 %v1401
    %v1522 = vunpack.c.h.b16 %v1401
    %v1523 = vunpack.c.l.b16 %v1402
    %v1524 = vunpack.c.h.b16 %v1402
    %v1525 = vunpack.c.l.b16 %v1403
    %v1526 = vunpack.c.h.b16 %v1403
    %v1527 = vunpack.c.l.b16 %v1404
    %v1528 = vunpack.c.h.b16 %v1404
    %v1529 = vunpack.c.l.b16 %v1405
    %v1530 = vunpack.c.h.b16 %v1405
    %v1531 = vunpack.c.l.b16 %v1406
    %v1532 = vunpack.c.h.b16 %v1406
    %v1533 = vunpack.c.l.b16 %v1407
    %v1534 = vunpack.c.h.b16 %v1407
    %v1535 = vunpack.c.l.b16 %v1408
    %v1536 = vunpack.c.h.b16 %v1408
    %v1537 = vunpack.c.l.b16 %v1409
    %v1538 = vunpack.c.h.b16 %v1409
    %v1539 = vunpack.c.l.b16 %v1410
    %v1540 = vunpack.c.h.b16 %v1410
    %v1541 = vunpack.c.l.b16 %v1411
    %v1542 = vunpack.c.h.b16 %v1411
    %v1543 = vunpack.c.l.b16 %v1412
    %v1544 = vunpack.c.h.b16 %v1412
    %v1545 = vunpack.c.l.b16 %v1413
    %v1546 = vunpack.c.h.b16 %v1413
    %v1547 = vunpack.c.l.b16 %v1414
    %v1548 = vunpack.c.h.b16 %v1414
    %v1549 = vunpack.c.l.b16 %v1415
    %v1550 = vunpack.c.h.b16 %v1415
    %v1551 = vunpack.c.l.b16 %v1416
    %v1552 = vunpack.c.h.b16 %v1416
    %v1553 = vunpack.c.l.b16 %v1417
    %v1554 = vunpack.c.h.b16 %v1417
    %v1555 = vunpack.c.l.b16 %v1418
    %v1556 = vunpack.c.h.b16 %v1418
    %v1557 = vunpack.c.l.b16 %v1419
    %v1558 = vunpack.c.h.b16 %v1419
    %v1559 = vunpack.c.l.b16 %v1420
    %v1560 = vunpack.c.h.b16 %v1420
    %v1561 = vunpack.c.l.b16 %v1421
    %v1562 = vunpack.c.h.b16 %v1421
    %v1563 = vunpack.c.l.b16 %v1422
    %v1564 = vunpack.c.h.b16 %v1422
    %v1565 = vunpack.c.l.b16 %v1423
    %v1566 = vunpack.c.h.b16 %v1423
    %v1567 = vunpack.c.l.b16 %v1424
    %v1568 = vunpack.c.h.b16 %v1424
    %v1569 = vunpack.c.l.b16 %v1425
    %v1570 = vunpack.c.h.b16 %v1425
    %v1571 = vunpack.c.l.b16 %v1426
    %v1572 = vunpack.c.h.b16 %v1426
    %v1573 = vunpack.c.l.b16 %v1427
    %v1574 = vunpack.c.h.b16 %v1427
    %v1575 = vunpack.c.l.b16 %v1428
    %v1576 = vunpack.c.h.b16 %v1428
    %v1577 = vunpack.c.l.b16 %v1429
    %v1578 = vunpack.c.h.b16 %v1429
    %v1579 = vunpack.c.l.b16 %v1430
    %v1580 = vunpack.c.h.b16 %v1430
    %v1581 = vunpack.c.l.b16 %v1431
    %v1582 = vunpack.c.h.b16 %v1431
    %v1583 = vunpack.c.l.b16 %v1432
    %v1584 = vunpack.c.h.b16 %v1432
    %v1585 = vunpack.c.l.b16 %v1433
    %v1586 = vunpack.c.h.b16 %v1433
    %v1587 = vunpack.c.l.b16 %v1434
    %v1588 = vunpack.c.h.b16 %v1434
    %v1589 = vunpack.c.l.b16 %v1435
    %v1590 = vunpack.c.h.b16 %v1435
    %v1591 = vunpack.c.l.b16 %v1436
    %v1592 = vunpack.c.h.b16 %v1436
    %v1593 = vunpack.c.l.b16 %v1437
    %v1594 = vunpack.c.h.b16 %v1437
    %v1595 = vunpack.c.l.b16 %v1438
    %v1596 = vunpack.c.h.b16 %v1438
    %v1597 = vunpack.c.l.b16 %v1439
    %v1598 = vunpack.c.h.b16 %v1439
    %v1599 = vunpack.c.l.b16 %v1440
    %v1600 = vunpack.c.h.b16 %v1440
    %v1601 = vpack.c.b16 %v1507, %v1505
    %v1602 = vpack.c.b16 %v1508, %v1506
    %v1603 = vpack.c.b16 %v1511, %v1509
    %v1604 = vpack.c.b16 %v1512, %v1510
    %v1605 = vpack.c.b16 %v1515, %v1513
    %v1606 = vpack.c.b16 %v1516, %v1514
    %v1607 = vpack.c.b16 %v1519, %v1517
    %v1608 = vpack.c.b16 %v1520, %v1518
    %v1609 = vpack.c.b16 %v1523, %v1521
    %v1610 = vpack.c.b16 %v1524, %v1522
    %v1611 = vpack.c.b16 %v1527, %v1525
    %v1612 = vpack.c.b16 %v1528, %v1526
    %v1613 = vpack.c.b16 %v1531, %v1529
    %v1614 = vpack.c.b16 %v1532, %v1530
    %v1615 = vpack.c.b16 %v1535, %v1533
    %v1616 = vpack.c.b16 %v1536, %v1534
    %v1617 = vpack.c.b16 %v1539, %v1537
    %v1618 = vpack.c.b16 %v1540, %v1538
    %v1619 = vpack.c.b16 %v1543, %v1541
    %v1620 = vpack.c.b16 %v1544, %v1542
    %v1621 = vpack.c.b16 %v1547, %v1545
    %v1622 = vpack.c.b16 %v1548, %v1546
    %v1623 = vpack.c.b16 %v1551, %v1549
    %v1624 = vpack.c.b16 %v1552, %v1550
    %v1625 = vpack.c.b16 %v1555, %v1553
    %v1626 = vpack.c.b16 %v1556, %v1554
    %v1627 = vpack.c.b16 %v1559, %v1557
    %v1628 = vpack.c.b16 %v1560, %v1558
    %v1629 = vpack.c.b16 %v1563, %v1561
    %v1630 = vpack.c.b16 %v1564, %v1562
    %v1631 = vpack.c.b16 %v1567, %v1565
    %v1632 = vpack.c.b16 %v1568, %v1566
    %v1633 = vpack.c.b16 %v1571, %v1569
    %v1634 = vpack.c.b16 %v1572, %v1570
    %v1635 = vpack.c.b16 %v1575, %v1573
    %v1636 = vpack.c.b16 %v1576, %v1574
    %v1637 = vpack.c.b16 %v1579, %v1577
    %v1638 = vpack.c.b16 %v1580, %v1578
    %v1639 = vpack.c.b16 %v1583, %v1581
    %v1640 = vpack.c.b16 %v1584, %v1582
    %v1641 = vpack.c.b16 %v1587, %v1585
    %v1642 = vpack.c.b16 %v1588, %v1586
    %v1643 = vpack.c.b16 %v1591, %v1589
    %v1644 = vpack.c.b16 %v1592, %v1590
    %v1645 = vpack.c.b16 %v1595, %v1593
    %v1646 = vpack.c.b16 %v1596, %v1594
    %v1647 = vpack.c.b16 %v1599, %v1597
    %v1648 = vpack.c.b16 %v1600, %v1598
    %1697 = vmatprep.subr.bf16.mxu0 %v1602
    %1698 = vmatpush1.bf16.msra.mxu0 %v1601
    %1699 = vmatprep.subr.bf16.mxu0 %v1604
    %1700 = vmatpush1.bf16.msra.mxu0 %v1603
    %1701 = vmatprep.subr.bf16.mxu0 %v1606
    %1702 = vmatpush1.bf16.msra.mxu0 %v1605
    %1703 = vmatprep.subr.bf16.mxu0 %v1608
    %1704 = vmatpush1.bf16.msra.mxu0 %v1607
    %1705 = vmatprep.subr.bf16.mxu0 %v1610
    %1706 = vmatpush1.bf16.msra.mxu0 %v1609
    %1707 = vmatprep.subr.bf16.mxu0 %v1612
    %1708 = vmatpush1.bf16.msra.mxu0 %v1611
    %1709 = vmatprep.subr.bf16.mxu0 %v1614
    %1710 = vmatpush1.bf16.msra.mxu0 %v1613
    %1711 = vmatprep.subr.bf16.mxu0 %v1616
    %1712 = vmatpush1.bf16.msra.mxu0 %v1615
    %1713 = vmatprep.subr.bf16.mxu0 %v1618
    %1714 = vmatpush1.bf16.msra.mxu0 %v1617
    %1715 = vmatprep.subr.bf16.mxu0 %v1620
    %1716 = vmatpush1.bf16.msra.mxu0 %v1619
    %1717 = vmatprep.subr.bf16.mxu0 %v1622
    %1718 = vmatpush1.bf16.msra.mxu0 %v1621
    %1719 = vmatprep.subr.bf16.mxu0 %v1624
    %1720 = vmatpush1.bf16.msra.mxu0 %v1623
    %1721 = vmatprep.subr.bf16.mxu0 %v1626
    %1722 = vmatpush1.bf16.msra.mxu0 %v1625
    %1723 = vmatprep.subr.bf16.mxu0 %v1628
    %1724 = vmatpush1.bf16.msra.mxu0 %v1627
    %1725 = vmatprep.subr.bf16.mxu0 %v1630
    %1726 = vmatpush1.bf16.msra.mxu0 %v1629
    %1727 = vmatprep.subr.bf16.mxu0 %v1632
    %1728 = vmatpush1.bf16.msra.mxu0 %v1631
    %1729 = vmatprep.mubr.bf16.mxu0 %v1442
    %1730 = vmatmul.mubr.bf16.gmra.mrb[0].mxu0 %v1441
    %v1731 = vpop.f32.mrb[0].mxu0
    %v1732 = vadd.f32 %v1450, %v1731
    %v1733 = vpop.f32.mrb[0].mxu0
    %v1734 = vadd.f32 %v1454, %v1733
    %v1735 = vpop.f32.mrb[0].mxu0
    %v1736 = vpop.f32.mrb[0].mxu0
    %1737 = vdwg.mxu0
    %1738 = vmatprep.subr.bf16.mxu0 %v1634
    %1739 = vmatpush1.bf16.msra.mxu0 %v1633
    %1740 = vmatprep.subr.bf16.mxu0 %v1636
    %1741 = vmatpush1.bf16.msra.mxu0 %v1635
    %1742 = vmatprep.subr.bf16.mxu0 %v1638
    %1743 = vmatpush1.bf16.msra.mxu0 %v1637
    %1744 = vmatprep.subr.bf16.mxu0 %v1640
    %1745 = vmatpush1.bf16.msra.mxu0 %v1639
    %1746 = vmatprep.subr.bf16.mxu0 %v1642
    %1747 = vmatpush1.bf16.msra.mxu0 %v1641
    %1748 = vmatprep.subr.bf16.mxu0 %v1644
    %1749 = vmatpush1.bf16.msra.mxu0 %v1643
    %1750 = vmatprep.subr.bf16.mxu0 %v1646
    %1751 = vmatpush1.bf16.msra.mxu0 %v1645
    %1752 = vmatprep.subr.bf16.mxu0 %v1648
    %1753 = vmatpush1.bf16.msra.mxu0 %v1647
    %1754 = vmatprep.subr.bf16.mxu0 0
    %1755 = vmatpush1.bf16.msra.mxu0 0
    %1756 = vmatprep.subr.bf16.mxu0 0
    %1757 = vmatpush1.bf16.msra.mxu0 0
    %1758 = vmatprep.subr.bf16.mxu0 0
    %1759 = vmatpush1.bf16.msra.mxu0 0
    %1760 = vmatprep.subr.bf16.mxu0 0
    %1761 = vmatpush1.bf16.msra.mxu0 0
    %1762 = vmatprep.subr.bf16.mxu0 0
    %1763 = vmatpush1.bf16.msra.mxu0 0
    %1764 = vmatprep.subr.bf16.mxu0 0
    %1765 = vmatpush1.bf16.msra.mxu0 0
    %1766 = vmatprep.subr.bf16.mxu0 0
    %1767 = vmatpush1.bf16.msra.mxu0 0
    %1768 = vmatprep.subr.bf16.mxu0 0
    %1769 = vmatpush1.bf16.msra.mxu0 0
    %1770 = vmatprep.mubr.bf16.mxu0 0
    %1771 = vmatmul.mubr.bf16.gmra.mrb[0].mxu0 %v1443
    %v1772 = vpop.f32.mrb[0].mxu0
    %v1773 = vadd.f32 %v1732, %v1772
    %v1774 = vpop.f32.mrb[0].mxu0
    %v1775 = vadd.f32 %v1734, %v1774
    %v1776 = vpop.f32.mrb[0].mxu0
    %v1777 = vpop.f32.mrb[0].mxu0
    %1778 = vdwg.mxu0
    %v1779 = vmax.f32 %v1773, 0.0
    %v1780 = vmax.f32 %v1775, 0.0
    %v1781 = vld [vmem:[#allocation4 + $0xac0] sm:$0xff]
    %v1782 = vld [vmem:[#allocation4 + $0xac8] sm:$0xff]
    %v1783 = vld [vmem:[#allocation4 + $0xad0] sm:$0xff]
    %v1784 = vld [vmem:[#allocation4 + $0xad8] sm:$0xff]
    %v1785 = vld [vmem:[#allocation4 + $0xae0] sm:$0xff]
    %v1786 = vld [vmem:[#allocation4 + $0xae8] sm:$0xff]
    %v1787 = vld [vmem:[#allocation4 + $0xaf0] sm:$0xff]
    %v1788 = vld [vmem:[#allocation4 + $0xaf8] sm:$0xff]
    %v1789 = vld [vmem:[#allocation4 + $0xb00] sm:$0xff]
    %v1790 = vld [vmem:[#allocation4 + $0xb08] sm:$0xff]
    %v1791 = vld [vmem:[#allocation4 + $0xb10] sm:$0xff]
    %v1792 = vld [vmem:[#allocation4 + $0xb18] sm:$0xff]
    %v1793 = vld [vmem:[#allocation4 + $0xb20] sm:$0xff]
    %v1794 = vld [vmem:[#allocation4 + $0xb28] sm:$0xff]
    %v1795 = vld [vmem:[#allocation4 + $0xb30] sm:$0xff]
    %v1796 = vld [vmem:[#allocation4 + $0xb38] sm:$0xff]
    %v1797 = vld [vmem:[#allocation4 + $0xb40] sm:$0xff]
    %v1798 = vld [vmem:[#allocation4 + $0xb48] sm:$0xff]
    %v1799 = vld [vmem:[#allocation4 + $0xb50] sm:$0xff]
    %v1800 = vld [vmem:[#allocation4 + $0xb58] sm:$0xff]
    %v1801 = vld [vmem:[#allocation4 + $0xb60] sm:$0xff]
    %v1802 = vld [vmem:[#allocation4 + $0xb68] sm:$0xff]
    %v1803 = vld [vmem:[#allocation4 + $0xb70] sm:$0xff]
    %v1804 = vld [vmem:[#allocation4 + $0xb78] sm:$0xff]
    %v1805 = vld [vmem:[#allocation4 + $0xb80] sm:$0xff]
    %v1806 = vld [vmem:[#allocation4 + $0xb88] sm:$0xff]
    %v1807 = vld [vmem:[#allocation4 + $0xb90] sm:$0xff]
    %v1808 = vld [vmem:[#allocation4 + $0xb98] sm:$0xff]
    %v1809 = vld [vmem:[#allocation4 + $0xba0] sm:$0xff]
    %v1810 = vld [vmem:[#allocation4 + $0xba8] sm:$0xff]
    %v1811 = vld [vmem:[#allocation4 + $0xbb0] sm:$0xff]
    %v1812 = vld [vmem:[#allocation4 + $0xbb8] sm:$0xff]
    %v1813 = vld [vmem:[#allocation4 + $0xbc0] sm:$0xff]
    %v1814 = vld [vmem:[#allocation4 + $0xbc8] sm:$0xff]
    %v1815 = vld [vmem:[#allocation4 + $0xbd0] sm:$0xff]
    %v1816 = vld [vmem:[#allocation4 + $0xbd8] sm:$0xff]
    %v1817 = vld [vmem:[#allocation4 + $0xbe0] sm:$0xff]
    %v1818 = vld [vmem:[#allocation4 + $0xbe8] sm:$0xff]
    %v1819 = vld [vmem:[#allocation4 + $0xbf0] sm:$0xff]
    %v1820 = vld [vmem:[#allocation4 + $0xbf8] sm:$0xff]
    %v1821 = vld [vmem:[#allocation4 + $0xc00] sm:$0xff]
    %v1822 = vld [vmem:[#allocation4 + $0xc08] sm:$0xff]
    %v1823 = vld [vmem:[#allocation4 + $0xc10] sm:$0xff]
    %v1824 = vld [vmem:[#allocation4 + $0xc18] sm:$0xff]
    %v1825 = vld [vmem:[#allocation4 + $0xc20] sm:$0xff]
    %v1826 = vld [vmem:[#allocation4 + $0xc28] sm:$0xff]
    %v1827 = vld [vmem:[#allocation4 + $0xc30] sm:$0xff]
    %v1828 = vld [vmem:[#allocation4 + $0xc38] sm:$0xff]
    %v1829 = vld [vmem:[#allocation4 + $0xc40] sm:$0xff]
    %v1830 = vld [vmem:[#allocation4 + $0xc48] sm:$0xff]
    %v1831 = vld [vmem:[#allocation4 + $0xc50] sm:$0xff]
    %v1832 = vld [vmem:[#allocation4 + $0xc58] sm:$0xff]
    %v1833 = vld [vmem:[#allocation4 + $0xc60] sm:$0xff]
    %v1834 = vld [vmem:[#allocation4 + $0xc68] sm:$0xff]
    %v1835 = vld [vmem:[#allocation4 + $0xc70] sm:$0xff]
    %v1836 = vld [vmem:[#allocation4 + $0xc78] sm:$0xff]
    %v1837 = vld [vmem:[#allocation4 + $0xc80] sm:$0xff]
    %v1838 = vld [vmem:[#allocation4 + $0xc88] sm:$0xff]
    %v1839 = vld [vmem:[#allocation4 + $0xc90] sm:$0xff]
    %v1840 = vld [vmem:[#allocation4 + $0xc98] sm:$0xff]
    %v1841 = vld [vmem:[#allocation4 + $0xca0] sm:$0xff]
    %v1842 = vld [vmem:[#allocation4 + $0xca8] sm:$0xff]
    %v1843 = vld [vmem:[#allocation4 + $0xcb0] sm:$0xff]
    %v1844 = vld [vmem:[#allocation4 + $0xcb8] sm:$0xff]
    %v1845 = vpack.c.bf16 %v1779, %v1779
    %v1846 = vpack.c.bf16 %v1780, %v1780
    %v1911 = vunpack.c.l.b16 %v1781
    %v1912 = vunpack.c.h.b16 %v1781
    %v1913 = vunpack.c.l.b16 %v1782
    %v1914 = vunpack.c.h.b16 %v1782
    %v1915 = vunpack.c.l.b16 %v1783
    %v1916 = vunpack.c.h.b16 %v1783
    %v1917 = vunpack.c.l.b16 %v1784
    %v1918 = vunpack.c.h.b16 %v1784
    %v1919 = vunpack.c.l.b16 %v1785
    %v1920 = vunpack.c.h.b16 %v1785
    %v1921 = vunpack.c.l.b16 %v1786
    %v1922 = vunpack.c.h.b16 %v1786
    %v1923 = vunpack.c.l.b16 %v1787
    %v1924 = vunpack.c.h.b16 %v1787
    %v1925 = vunpack.c.l.b16 %v1788
    %v1926 = vunpack.c.h.b16 %v1788
    %v1927 = vunpack.c.l.b16 %v1789
    %v1928 = vunpack.c.h.b16 %v1789
    %v1929 = vunpack.c.l.b16 %v1790
    %v1930 = vunpack.c.h.b16 %v1790
    %v1931 = vunpack.c.l.b16 %v1791
    %v1932 = vunpack.c.h.b16 %v1791
    %v1933 = vunpack.c.l.b16 %v1792
    %v1934 = vunpack.c.h.b16 %v1792
    %v1935 = vunpack.c.l.b16 %v1793
    %v1936 = vunpack.c.h.b16 %v1793
    %v1937 = vunpack.c.l.b16 %v1794
    %v1938 = vunpack.c.h.b16 %v1794
    %v1939 = vunpack.c.l.b16 %v1795
    %v1940 = vunpack.c.h.b16 %v1795
    %v1941 = vunpack.c.l.b16 %v1796
    %v1942 = vunpack.c.h.b16 %v1796
    %v1943 = vunpack.c.l.b16 %v1797
    %v1944 = vunpack.c.h.b16 %v1797
    %v1945 = vunpack.c.l.b16 %v1798
    %v1946 = vunpack.c.h.b16 %v1798
    %v1947 = vunpack.c.l.b16 %v1799
    %v1948 = vunpack.c.h.b16 %v1799
    %v1949 = vunpack.c.l.b16 %v1800
    %v1950 = vunpack.c.h.b16 %v1800
    %v1951 = vunpack.c.l.b16 %v1801
    %v1952 = vunpack.c.h.b16 %v1801
    %v1953 = vunpack.c.l.b16 %v1802
    %v1954 = vunpack.c.h.b16 %v1802
    %v1955 = vunpack.c.l.b16 %v1803
    %v1956 = vunpack.c.h.b16 %v1803
    %v1957 = vunpack.c.l.b16 %v1804
    %v1958 = vunpack.c.h.b16 %v1804
    %v1959 = vunpack.c.l.b16 %v1805
    %v1960 = vunpack.c.h.b16 %v1805
    %v1961 = vunpack.c.l.b16 %v1806
    %v1962 = vunpack.c.h.b16 %v1806
    %v1963 = vunpack.c.l.b16 %v1807
    %v1964 = vunpack.c.h.b16 %v1807
    %v1965 = vunpack.c.l.b16 %v1808
    %v1966 = vunpack.c.h.b16 %v1808
    %v1967 = vunpack.c.l.b16 %v1809
    %v1968 = vunpack.c.h.b16 %v1809
    %v1969 = vunpack.c.l.b16 %v1810
    %v1970 = vunpack.c.h.b16 %v1810
    %v1971 = vunpack.c.l.b16 %v1811
    %v1972 = vunpack.c.h.b16 %v1811
    %v1973 = vunpack.c.l.b16 %v1812
    %v1974 = vunpack.c.h.b16 %v1812
    %v1975 = vunpack.c.l.b16 %v1813
    %v1976 = vunpack.c.h.b16 %v1813
    %v1977 = vunpack.c.l.b16 %v1814
    %v1978 = vunpack.c.h.b16 %v1814
    %v1979 = vunpack.c.l.b16 %v1815
    %v1980 = vunpack.c.h.b16 %v1815
    %v1981 = vunpack.c.l.b16 %v1816
    %v1982 = vunpack.c.h.b16 %v1816
    %v1983 = vunpack.c.l.b16 %v1817
    %v1984 = vunpack.c.h.b16 %v1817
    %v1985 = vunpack.c.l.b16 %v1818
    %v1986 = vunpack.c.h.b16 %v1818
    %v1987 = vunpack.c.l.b16 %v1819
    %v1988 = vunpack.c.h.b16 %v1819
    %v1989 = vunpack.c.l.b16 %v1820
    %v1990 = vunpack.c.h.b16 %v1820
    %v1991 = vunpack.c.l.b16 %v1821
    %v1992 = vunpack.c.h.b16 %v1821
    %v1993 = vunpack.c.l.b16 %v1822
    %v1994 = vunpack.c.h.b16 %v1822
    %v1995 = vunpack.c.l.b16 %v1823
    %v1996 = vunpack.c.h.b16 %v1823
    %v1997 = vunpack.c.l.b16 %v1824
    %v1998 = vunpack.c.h.b16 %v1824
    %v1999 = vunpack.c.l.b16 %v1825
    %v2000 = vunpack.c.h.b16 %v1825
    %v2001 = vunpack.c.l.b16 %v1826
    %v2002 = vunpack.c.h.b16 %v1826
    %v2003 = vunpack.c.l.b16 %v1827
    %v2004 = vunpack.c.h.b16 %v1827
    %v2005 = vunpack.c.l.b16 %v1828
    %v2006 = vunpack.c.h.b16 %v1828
    %v2007 = vunpack.c.l.b16 %v1829
    %v2008 = vunpack.c.h.b16 %v1829
    %v2009 = vunpack.c.l.b16 %v1830
    %v2010 = vunpack.c.h.b16 %v1830
    %v2011 = vunpack.c.l.b16 %v1831
    %v2012 = vunpack.c.h.b16 %v1831
    %v2013 = vunpack.c.l.b16 %v1832
    %v2014 = vunpack.c.h.b16 %v1832
    %v2015 = vunpack.c.l.b16 %v1833
    %v2016 = vunpack.c.h.b16 %v1833
    %v2017 = vunpack.c.l.b16 %v1834
    %v2018 = vunpack.c.h.b16 %v1834
    %v2019 = vunpack.c.l.b16 %v1835
    %v2020 = vunpack.c.h.b16 %v1835
    %v2021 = vunpack.c.l.b16 %v1836
    %v2022 = vunpack.c.h.b16 %v1836
    %v2023 = vunpack.c.l.b16 %v1837
    %v2024 = vunpack.c.h.b16 %v1837
    %v2025 = vunpack.c.l.b16 %v1838
    %v2026 = vunpack.c.h.b16 %v1838
    %v2027 = vunpack.c.l.b16 %v1839
    %v2028 = vunpack.c.h.b16 %v1839
    %v2029 = vunpack.c.l.b16 %v1840
    %v2030 = vunpack.c.h.b16 %v1840
    %v2031 = vunpack.c.l.b16 %v1841
    %v2032 = vunpack.c.h.b16 %v1841
    %v2033 = vunpack.c.l.b16 %v1842
    %v2034 = vunpack.c.h.b16 %v1842
    %v2035 = vunpack.c.l.b16 %v1843
    %v2036 = vunpack.c.h.b16 %v1843
    %v2037 = vunpack.c.l.b16 %v1844
    %v2038 = vunpack.c.h.b16 %v1844
    %v2039 = vpack.c.b16 %v1915, %v1911
    %v2040 = vpack.c.b16 %v1916, %v1912
    %v2041 = vpack.c.b16 %v1917, %v1913
    %v2042 = vpack.c.b16 %v1918, %v1914
    %v2043 = vpack.c.b16 %v1923, %v1919
    %v2044 = vpack.c.b16 %v1924, %v1920
    %v2045 = vpack.c.b16 %v1925, %v1921
    %v2046 = vpack.c.b16 %v1926, %v1922
    %v2047 = vpack.c.b16 %v1931, %v1927
    %v2048 = vpack.c.b16 %v1932, %v1928
    %v2049 = vpack.c.b16 %v1933, %v1929
    %v2050 = vpack.c.b16 %v1934, %v1930
    %v2051 = vpack.c.b16 %v1939, %v1935
    %v2052 = vpack.c.b16 %v1940, %v1936
    %v2053 = vpack.c.b16 %v1941, %v1937
    %v2054 = vpack.c.b16 %v1942, %v1938
    %v2055 = vpack.c.b16 %v1947, %v1943
    %v2056 = vpack.c.b16 %v1948, %v1944
    %v2057 = vpack.c.b16 %v1949, %v1945
    %v2058 = vpack.c.b16 %v1950, %v1946
    %v2059 = vpack.c.b16 %v1955, %v1951
    %v2060 = vpack.c.b16 %v1956, %v1952
    %v2061 = vpack.c.b16 %v1957, %v1953
    %v2062 = vpack.c.b16 %v1958, %v1954
    %v2063 = vpack.c.b16 %v1963, %v1959
    %v2064 = vpack.c.b16 %v1964, %v1960
    %v2065 = vpack.c.b16 %v1965, %v1961
    %v2066 = vpack.c.b16 %v1966, %v1962
    %v2067 = vpack.c.b16 %v1971, %v1967
    %v2068 = vpack.c.b16 %v1972, %v1968
    %v2069 = vpack.c.b16 %v1973, %v1969
    %v2070 = vpack.c.b16 %v1974, %v1970
    %v2071 = vpack.c.b16 %v1979, %v1975
    %v2072 = vpack.c.b16 %v1980, %v1976
    %v2073 = vpack.c.b16 %v1981, %v1977
    %v2074 = vpack.c.b16 %v1982, %v1978
    %v2075 = vpack.c.b16 %v1987, %v1983
    %v2076 = vpack.c.b16 %v1988, %v1984
    %v2077 = vpack.c.b16 %v1989, %v1985
    %v2078 = vpack.c.b16 %v1990, %v1986
    %v2079 = vpack.c.b16 %v1995, %v1991
    %v2080 = vpack.c.b16 %v1996, %v1992
    %v2081 = vpack.c.b16 %v1997, %v1993
    %v2082 = vpack.c.b16 %v1998, %v1994
    %v2083 = vpack.c.b16 %v2003, %v1999
    %v2084 = vpack.c.b16 %v2004, %v2000
    %v2085 = vpack.c.b16 %v2005, %v2001
    %v2086 = vpack.c.b16 %v2006, %v2002
    %v2087 = vpack.c.b16 %v2011, %v2007
    %v2088 = vpack.c.b16 %v2012, %v2008
    %v2089 = vpack.c.b16 %v2013, %v2009
    %v2090 = vpack.c.b16 %v2014, %v2010
    %v2091 = vpack.c.b16 %v2019, %v2015
    %v2092 = vpack.c.b16 %v2020, %v2016
    %v2093 = vpack.c.b16 %v2021, %v2017
    %v2094 = vpack.c.b16 %v2022, %v2018
    %v2095 = vpack.c.b16 %v2027, %v2023
    %v2096 = vpack.c.b16 %v2028, %v2024
    %v2097 = vpack.c.b16 %v2029, %v2025
    %v2098 = vpack.c.b16 %v2030, %v2026
    %v2099 = vpack.c.b16 %v2035, %v2031
    %v2100 = vpack.c.b16 %v2036, %v2032
    %v2101 = vpack.c.b16 %v2037, %v2033
    %v2102 = vpack.c.b16 %v2038, %v2034
    %2167 = vmatprep.subr.bf16.mxu0 %v2040
    %2168 = vmatpush1.bf16.msra.mxu0 %v2039
    %2169 = vmatprep.subr.bf16.mxu0 %v2044
    %2170 = vmatpush1.bf16.msra.mxu0 %v2043
    %2171 = vmatprep.subr.bf16.mxu0 %v2048
    %2172 = vmatpush1.bf16.msra.mxu0 %v2047
    %2173 = vmatprep.subr.bf16.mxu0 %v2052
    %2174 = vmatpush1.bf16.msra.mxu0 %v2051
    %2175 = vmatprep.subr.bf16.mxu0 %v2056
    %2176 = vmatpush1.bf16.msra.mxu0 %v2055
    %2177 = vmatprep.subr.bf16.mxu0 %v2060
    %2178 = vmatpush1.bf16.msra.mxu0 %v2059
    %2179 = vmatprep.subr.bf16.mxu0 %v2064
    %2180 = vmatpush1.bf16.msra.mxu0 %v2063
    %2181 = vmatprep.subr.bf16.mxu0 %v2068
    %2182 = vmatpush1.bf16.msra.mxu0 %v2067
    %2183 = vmatprep.subr.bf16.mxu0 %v2072
    %2184 = vmatpush1.bf16.msra.mxu0 %v2071
    %2185 = vmatprep.subr.bf16.mxu0 %v2076
    %2186 = vmatpush1.bf16.msra.mxu0 %v2075
    %2187 = vmatprep.subr.bf16.mxu0 %v2080
    %2188 = vmatpush1.bf16.msra.mxu0 %v2079
    %2189 = vmatprep.subr.bf16.mxu0 %v2084
    %2190 = vmatpush1.bf16.msra.mxu0 %v2083
    %2191 = vmatprep.subr.bf16.mxu0 %v2088
    %2192 = vmatpush1.bf16.msra.mxu0 %v2087
    %2193 = vmatprep.subr.bf16.mxu0 %v2092
    %2194 = vmatpush1.bf16.msra.mxu0 %v2091
    %2195 = vmatprep.subr.bf16.mxu0 %v2096
    %2196 = vmatpush1.bf16.msra.mxu0 %v2095
    %2197 = vmatprep.subr.bf16.mxu0 %v2100
    %2198 = vmatpush1.bf16.msra.mxu0 %v2099
    %2199 = vmatprep.mubr.bf16.mxu0 %v1846
    %2200 = vmatmul.mubr.bf16.gmra.mrb[0].mxu0 %v1845
    %v2201 = vpop.f32.mrb[0].mxu0
    %v2202 = vadd.f32 0.0, %v2201
    %v2203 = vpop.f32.mrb[0].mxu0
    %v2204 = vadd.f32 0.0, %v2203
    %v2205 = vpop.f32.mrb[0].mxu0
    %v2206 = vpop.f32.mrb[0].mxu0
    %2207 = vdwg.mxu0
    %2208 = vmatprep.subr.bf16.mxu0 %v2042
    %2209 = vmatpush1.bf16.msra.mxu0 %v2041
    %2210 = vmatprep.subr.bf16.mxu0 %v2046
    %2211 = vmatpush1.bf16.msra.mxu0 %v2045
    %2212 = vmatprep.subr.bf16.mxu0 %v2050
    %2213 = vmatpush1.bf16.msra.mxu0 %v2049
    %2214 = vmatprep.subr.bf16.mxu0 %v2054
    %2215 = vmatpush1.bf16.msra.mxu0 %v2053
    %2216 = vmatprep.subr.bf16.mxu0 %v2058
    %2217 = vmatpush1.bf16.msra.mxu0 %v2057
    %2218 = vmatprep.subr.bf16.mxu0 %v2062
    %2219 = vmatpush1.bf16.msra.mxu0 %v2061
    %2220 = vmatprep.subr.bf16.mxu0 %v2066
    %2221 = vmatpush1.bf16.msra.mxu0 %v2065
    %2222 = vmatprep.subr.bf16.mxu0 %v2070
    %2223 = vmatpush1.bf16.msra.mxu0 %v2069
    %2224 = vmatprep.subr.bf16.mxu0 %v2074
    %2225 = vmatpush1.bf16.msra.mxu0 %v2073
    %2226 = vmatprep.subr.bf16.mxu0 %v2078
    %2227 = vmatpush1.bf16.msra.mxu0 %v2077
    %2228 = vmatprep.subr.bf16.mxu0 %v2082
    %2229 = vmatpush1.bf16.msra.mxu0 %v2081
    %2230 = vmatprep.subr.bf16.mxu0 %v2086
    %2231 = vmatpush1.bf16.msra.mxu0 %v2085
    %2232 = vmatprep.subr.bf16.mxu0 %v2090
    %2233 = vmatpush1.bf16.msra.mxu0 %v2089
    %2234 = vmatprep.subr.bf16.mxu0 %v2094
    %2235 = vmatpush1.bf16.msra.mxu0 %v2093
    %2236 = vmatprep.subr.bf16.mxu0 %v2098
    %2237 = vmatpush1.bf16.msra.mxu0 %v2097
    %2238 = vmatprep.subr.bf16.mxu0 %v2102
    %2239 = vmatpush1.bf16.msra.mxu0 %v2101
    %2240 = vmatprep.mubr.bf16.mxu0 %v1846
    %2241 = vmatmul.mubr.bf16.gmra.mrb[0].mxu0 %v1845
    %v2242 = vpop.f32.mrb[0].mxu0
    %v2243 = vadd.f32 0.0, %v2242
    %v2244 = vpop.f32.mrb[0].mxu0
    %v2245 = vadd.f32 0.0, %v2244
    %v2246 = vpop.f32.mrb[0].mxu0
    %v2247 = vpop.f32.mrb[0].mxu0
    %2248 = vdwg.mxu0
    %v2249 = vld [vmem:[#allocation4 + $0xcc0] sm:$0xf]
    %v2250 = vld [vmem:[#allocation4 + $0xcd0] sm:$0xf]
    %v2251 = vpack.c.bf16 %v2243, %v2202
    %v2252 = vpack.c.bf16 %v2245, %v2204
    %s2253 = scalar_lea.vmem [#allocation6], 3
    %v2254 = vld [vmem:[%s2253] ss:$8 sm:$0x3]
    %v2256 = vlaneseq
    %v2257 = vshrl.u32 %v2256, 7
    %v2258 = vsub.s32 0, %v2257
    %v2259 = vrot.slane %v2254, %v2258
    %v2260 = vlaneseq
    %v2261 = vshrl.u32 %v2260, 7
    %v2262 = vsub.s32 1, %v2261
    %v2263 = vrot.slane %v2254, %v2262
    %v2268 = vunpack.c.l.b16 %v2249
    %v2269 = vunpack.c.l.b16 %v2250
    %v2270 = vpack.c.b16 %v2269, %v2268
    %v2272 = vsel %vm187, %v2270, 0
    %2274 = vmatprep.subr.bf16.mxu0 %v2252
    %2275 = vmatpush1.bf16.msra.mxu0 %v2251
    %2276 = vmatprep.subr.bf16.mxu0 0
    %2277 = vmatpush1.bf16.msra.mxu0 0
    %2278 = vmatprep.subr.bf16.mxu0 0
    %2279 = vmatpush1.bf16.msra.mxu0 0
    %2280 = vmatprep.subr.bf16.mxu0 0
    %2281 = vmatpush1.bf16.msra.mxu0 0
    %2282 = vmatprep.subr.bf16.mxu0 0
    %2283 = vmatpush1.bf16.msra.mxu0 0
    %2284 = vmatprep.subr.bf16.mxu0 0
    %2285 = vmatpush1.bf16.msra.mxu0 0
    %2286 = vmatprep.subr.bf16.mxu0 0
    %2287 = vmatpush1.bf16.msra.mxu0 0
    %2288 = vmatprep.subr.bf16.mxu0 0
    %2289 = vmatpush1.bf16.msra.mxu0 0
    %2290 = vmatprep.subr.bf16.mxu0 0
    %2291 = vmatpush1.bf16.msra.mxu0 0
    %2292 = vmatprep.subr.bf16.mxu0 0
    %2293 = vmatpush1.bf16.msra.mxu0 0
    %2294 = vmatprep.subr.bf16.mxu0 0
    %2295 = vmatpush1.bf16.msra.mxu0 0
    %2296 = vmatprep.subr.bf16.mxu0 0
    %2297 = vmatpush1.bf16.msra.mxu0 0
    %2298 = vmatprep.subr.bf16.mxu0 0
    %2299 = vmatpush1.bf16.msra.mxu0 0
    %2300 = vmatprep.subr.bf16.mxu0 0
    %2301 = vmatpush1.bf16.msra.mxu0 0
    %2302 = vmatprep.subr.bf16.mxu0 0
    %2303 = vmatpush1.bf16.msra.mxu0 0
    %2304 = vmatprep.subr.bf16.mxu0 0
    %2305 = vmatpush1.bf16.msra.mxu0 0
    %2306 = vmatprep.mubr.bf16.mxu0 0
    %2307 = vmatmul.mubr.bf16.gmra.mrb[0].mxu0 %v2272
    %v2308 = vpop.f32.mrb[0].mxu0
    %v2309 = vadd.f32 %v2259, %v2308
    %v2310 = vpop.f32.mrb[0].mxu0
    %v2311 = vadd.f32 %v2263, %v2310
    %v2312 = vpop.f32.mrb[0].mxu0
    %v2313 = vadd.f32 %v2259, %v2312
    %v2314 = vpop.f32.mrb[0].mxu0
    %v2315 = vadd.f32 %v2263, %v2314
    %2316 = vdwg.mxu0
    %v2317 = vmax.f32 %v2309, 0.0
    %v2318 = vmax.f32 %v2311, 0.0
    %v2319 = vmax.f32 %v2313, 0.0
    %v2320 = vmax.f32 %v2315, 0.0
    %v2321 = vld [vmem:[#allocation4 + $0xce0] sm:$0xff]
    %v2322 = vld [vmem:[#allocation4 + $0xce8] sm:$0xff]
    %v2323 = vld [vmem:[#allocation4 + $0xcf0] sm:$0xff]
    %v2324 = vld [vmem:[#allocation4 + $0xcf8] sm:$0xff]
    %v2325 = vld [vmem:[#allocation4 + $0xd00] sm:$0xff]
    %v2326 = vld [vmem:[#allocation4 + $0xd08] sm:$0xff]
    %v2327 = vld [vmem:[#allocation4 + $0xd10] sm:$0xff]
    %v2328 = vld [vmem:[#allocation4 + $0xd18] sm:$0xff]
    %v2329 = vld [vmem:[#allocation4 + $0xd20] sm:$0xff]
    %v2330 = vld [vmem:[#allocation4 + $0xd28] sm:$0xff]
    %v2331 = vld [vmem:[#allocation4 + $0xd30] sm:$0xff]
    %v2332 = vld [vmem:[#allocation4 + $0xd38] sm:$0xff]
    %v2333 = vld [vmem:[#allocation4 + $0xd40] sm:$0xff]
    %v2334 = vld [vmem:[#allocation4 + $0xd48] sm:$0xff]
    %v2335 = vld [vmem:[#allocation4 + $0xd50] sm:$0xff]
    %v2336 = vld [vmem:[#allocation4 + $0xd58] sm:$0xff]
    %v2337 = vld [vmem:[#allocation4 + $0xd60] sm:$0xff]
    %v2338 = vld [vmem:[#allocation4 + $0xd68] sm:$0xff]
    %v2339 = vld [vmem:[#allocation4 + $0xd70] sm:$0xff]
    %v2340 = vld [vmem:[#allocation4 + $0xd78] sm:$0xff]
    %v2341 = vld [vmem:[#allocation4 + $0xd80] sm:$0xff]
    %v2342 = vld [vmem:[#allocation4 + $0xd88] sm:$0xff]
    %v2343 = vld [vmem:[#allocation4 + $0xd90] sm:$0xff]
    %v2344 = vld [vmem:[#allocation4 + $0xd98] sm:$0xff]
    %v2345 = vld [vmem:[#allocation4 + $0xda0] sm:$0xff]
    %v2346 = vld [vmem:[#allocation4 + $0xda8] sm:$0xff]
    %v2347 = vld [vmem:[#allocation4 + $0xdb0] sm:$0xff]
    %v2348 = vld [vmem:[#allocation4 + $0xdb8] sm:$0xff]
    %v2349 = vld [vmem:[#allocation4 + $0xdc0] sm:$0xff]
    %v2350 = vld [vmem:[#allocation4 + $0xdc8] sm:$0xff]
    %v2351 = vld [vmem:[#allocation4 + $0xdd0] sm:$0xff]
    %v2352 = vld [vmem:[#allocation4 + $0xdd8] sm:$0xff]
    %v2353 = vld [vmem:[#allocation4 + $0xde0] sm:$0xff]
    %v2354 = vld [vmem:[#allocation4 + $0xde8] sm:$0xff]
    %v2355 = vld [vmem:[#allocation4 + $0xdf0] sm:$0xff]
    %v2356 = vld [vmem:[#allocation4 + $0xdf8] sm:$0xff]
    %v2357 = vld [vmem:[#allocation4 + $0xe00] sm:$0xff]
    %v2358 = vld [vmem:[#allocation4 + $0xe08] sm:$0xff]
    %v2359 = vld [vmem:[#allocation4 + $0xe10] sm:$0xff]
    %v2360 = vld [vmem:[#allocation4 + $0xe18] sm:$0xff]
    %v2361 = vld [vmem:[#allocation4 + $0xe20] sm:$0xff]
    %v2362 = vld [vmem:[#allocation4 + $0xe28] sm:$0xff]
    %v2363 = vld [vmem:[#allocation4 + $0xe30] sm:$0xff]
    %v2364 = vld [vmem:[#allocation4 + $0xe38] sm:$0xff]
    %v2365 = vld [vmem:[#allocation4 + $0xe40] sm:$0xff]
    %v2366 = vld [vmem:[#allocation4 + $0xe48] sm:$0xff]
    %v2367 = vld [vmem:[#allocation4 + $0xe50] sm:$0xff]
    %v2368 = vld [vmem:[#allocation4 + $0xe58] sm:$0xff]
    %v2369 = vld [vmem:[#allocation4 + $0xe60] sm:$0xff]
    %v2370 = vld [vmem:[#allocation4 + $0xe68] sm:$0xff]
    %v2371 = vld [vmem:[#allocation4 + $0xe70] sm:$0xff]
    %v2372 = vld [vmem:[#allocation4 + $0xe78] sm:$0xff]
    %v2373 = vld [vmem:[#allocation4 + $0xe80] sm:$0xff]
    %v2374 = vld [vmem:[#allocation4 + $0xe88] sm:$0xff]
    %v2375 = vld [vmem:[#allocation4 + $0xe90] sm:$0xff]
    %v2376 = vld [vmem:[#allocation4 + $0xe98] sm:$0xff]
    %v2377 = vld [vmem:[#allocation4 + $0xea0] sm:$0xff]
    %v2378 = vld [vmem:[#allocation4 + $0xea8] sm:$0xff]
    %v2379 = vld [vmem:[#allocation4 + $0xeb0] sm:$0xff]
    %v2380 = vld [vmem:[#allocation4 + $0xeb8] sm:$0xff]
    %v2381 = vld [vmem:[#allocation4 + $0xec0] sm:$0xff]
    %v2382 = vld [vmem:[#allocation4 + $0xec8] sm:$0xff]
    %v2383 = vld [vmem:[#allocation4 + $0xed0] sm:$0xff]
    %v2384 = vld [vmem:[#allocation4 + $0xed8] sm:$0xff]
    %v2385 = vpack.c.bf16 %v2319, %v2317
    %v2386 = vpack.c.bf16 %v2320, %v2318
    %v2451 = vunpack.c.l.b16 %v2321
    %v2452 = vunpack.c.h.b16 %v2321
    %v2453 = vunpack.c.l.b16 %v2322
    %v2454 = vunpack.c.h.b16 %v2322
    %v2455 = vunpack.c.l.b16 %v2323
    %v2456 = vunpack.c.h.b16 %v2323
    %v2457 = vunpack.c.l.b16 %v2324
    %v2458 = vunpack.c.h.b16 %v2324
    %v2459 = vunpack.c.l.b16 %v2325
    %v2460 = vunpack.c.h.b16 %v2325
    %v2461 = vunpack.c.l.b16 %v2326
    %v2462 = vunpack.c.h.b16 %v2326
    %v2463 = vunpack.c.l.b16 %v2327
    %v2464 = vunpack.c.h.b16 %v2327
    %v2465 = vunpack.c.l.b16 %v2328
    %v2466 = vunpack.c.h.b16 %v2328
    %v2467 = vunpack.c.l.b16 %v2329
    %v2468 = vunpack.c.h.b16 %v2329
    %v2469 = vunpack.c.l.b16 %v2330
    %v2470 = vunpack.c.h.b16 %v2330
    %v2471 = vunpack.c.l.b16 %v2331
    %v2472 = vunpack.c.h.b16 %v2331
    %v2473 = vunpack.c.l.b16 %v2332
    %v2474 = vunpack.c.h.b16 %v2332
    %v2475 = vunpack.c.l.b16 %v2333
    %v2476 = vunpack.c.h.b16 %v2333
    %v2477 = vunpack.c.l.b16 %v2334
    %v2478 = vunpack.c.h.b16 %v2334
    %v2479 = vunpack.c.l.b16 %v2335
    %v2480 = vunpack.c.h.b16 %v2335
    %v2481 = vunpack.c.l.b16 %v2336
    %v2482 = vunpack.c.h.b16 %v2336
    %v2483 = vunpack.c.l.b16 %v2337
    %v2484 = vunpack.c.h.b16 %v2337
    %v2485 = vunpack.c.l.b16 %v2338
    %v2486 = vunpack.c.h.b16 %v2338
    %v2487 = vunpack.c.l.b16 %v2339
    %v2488 = vunpack.c.h.b16 %v2339
    %v2489 = vunpack.c.l.b16 %v2340
    %v2490 = vunpack.c.h.b16 %v2340
    %v2491 = vunpack.c.l.b16 %v2341
    %v2492 = vunpack.c.h.b16 %v2341
    %v2493 = vunpack.c.l.b16 %v2342
    %v2494 = vunpack.c.h.b16 %v2342
    %v2495 = vunpack.c.l.b16 %v2343
    %v2496 = vunpack.c.h.b16 %v2343
    %v2497 = vunpack.c.l.b16 %v2344
    %v2498 = vunpack.c.h.b16 %v2344
    %v2499 = vunpack.c.l.b16 %v2345
    %v2500 = vunpack.c.h.b16 %v2345
    %v2501 = vunpack.c.l.b16 %v2346
    %v2502 = vunpack.c.h.b16 %v2346
    %v2503 = vunpack.c.l.b16 %v2347
    %v2504 = vunpack.c.h.b16 %v2347
    %v2505 = vunpack.c.l.b16 %v2348
    %v2506 = vunpack.c.h.b16 %v2348
    %v2507 = vunpack.c.l.b16 %v2349
    %v2508 = vunpack.c.h.b16 %v2349
    %v2509 = vunpack.c.l.b16 %v2350
    %v2510 = vunpack.c.h.b16 %v2350
    %v2511 = vunpack.c.l.b16 %v2351
    %v2512 = vunpack.c.h.b16 %v2351
    %v2513 = vunpack.c.l.b16 %v2352
    %v2514 = vunpack.c.h.b16 %v2352
    %v2515 = vunpack.c.l.b16 %v2353
    %v2516 = vunpack.c.h.b16 %v2353
    %v2517 = vunpack.c.l.b16 %v2354
    %v2518 = vunpack.c.h.b16 %v2354
    %v2519 = vunpack.c.l.b16 %v2355
    %v2520 = vunpack.c.h.b16 %v2355
    %v2521 = vunpack.c.l.b16 %v2356
    %v2522 = vunpack.c.h.b16 %v2356
    %v2523 = vunpack.c.l.b16 %v2357
    %v2524 = vunpack.c.h.b16 %v2357
    %v2525 = vunpack.c.l.b16 %v2358
    %v2526 = vunpack.c.h.b16 %v2358
    %v2527 = vunpack.c.l.b16 %v2359
    %v2528 = vunpack.c.h.b16 %v2359
    %v2529 = vunpack.c.l.b16 %v2360
    %v2530 = vunpack.c.h.b16 %v2360
    %v2531 = vunpack.c.l.b16 %v2361
    %v2532 = vunpack.c.h.b16 %v2361
    %v2533 = vunpack.c.l.b16 %v2362
    %v2534 = vunpack.c.h.b16 %v2362
    %v2535 = vunpack.c.l.b16 %v2363
    %v2536 = vunpack.c.h.b16 %v2363
    %v2537 = vunpack.c.l.b16 %v2364
    %v2538 = vunpack.c.h.b16 %v2364
    %v2539 = vunpack.c.l.b16 %v2365
    %v2540 = vunpack.c.h.b16 %v2365
    %v2541 = vunpack.c.l.b16 %v2366
    %v2542 = vunpack.c.h.b16 %v2366
    %v2543 = vunpack.c.l.b16 %v2367
    %v2544 = vunpack.c.h.b16 %v2367
    %v2545 = vunpack.c.l.b16 %v2368
    %v2546 = vunpack.c.h.b16 %v2368
    %v2547 = vunpack.c.l.b16 %v2369
    %v2548 = vunpack.c.h.b16 %v2369
    %v2549 = vunpack.c.l.b16 %v2370
    %v2550 = vunpack.c.h.b16 %v2370
    %v2551 = vunpack.c.l.b16 %v2371
    %v2552 = vunpack.c.h.b16 %v2371
    %v2553 = vunpack.c.l.b16 %v2372
    %v2554 = vunpack.c.h.b16 %v2372
    %v2555 = vunpack.c.l.b16 %v2373
    %v2556 = vunpack.c.h.b16 %v2373
    %v2557 = vunpack.c.l.b16 %v2374
    %v2558 = vunpack.c.h.b16 %v2374
    %v2559 = vunpack.c.l.b16 %v2375
    %v2560 = vunpack.c.h.b16 %v2375
    %v2561 = vunpack.c.l.b16 %v2376
    %v2562 = vunpack.c.h.b16 %v2376
    %v2563 = vunpack.c.l.b16 %v2377
    %v2564 = vunpack.c.h.b16 %v2377
    %v2565 = vunpack.c.l.b16 %v2378
    %v2566 = vunpack.c.h.b16 %v2378
    %v2567 = vunpack.c.l.b16 %v2379
    %v2568 = vunpack.c.h.b16 %v2379
    %v2569 = vunpack.c.l.b16 %v2380
    %v2570 = vunpack.c.h.b16 %v2380
    %v2571 = vunpack.c.l.b16 %v2381
    %v2572 = vunpack.c.h.b16 %v2381
    %v2573 = vunpack.c.l.b16 %v2382
    %v2574 = vunpack.c.h.b16 %v2382
    %v2575 = vunpack.c.l.b16 %v2383
    %v2576 = vunpack.c.h.b16 %v2383
    %v2577 = vunpack.c.l.b16 %v2384
    %v2578 = vunpack.c.h.b16 %v2384
    %v2579 = vpack.c.b16 %v2455, %v2451
    %v2580 = vpack.c.b16 %v2456, %v2452
    %v2581 = vpack.c.b16 %v2457, %v2453
    %v2582 = vpack.c.b16 %v2458, %v2454
    %v2583 = vpack.c.b16 %v2463, %v2459
    %v2584 = vpack.c.b16 %v2464, %v2460
    %v2585 = vpack.c.b16 %v2465, %v2461
    %v2586 = vpack.c.b16 %v2466, %v2462
    %v2587 = vpack.c.b16 %v2471, %v2467
    %v2588 = vpack.c.b16 %v2472, %v2468
    %v2589 = vpack.c.b16 %v2473, %v2469
    %v2590 = vpack.c.b16 %v2474, %v2470
    %v2591 = vpack.c.b16 %v2479, %v2475
    %v2592 = vpack.c.b16 %v2480, %v2476
    %v2593 = vpack.c.b16 %v2481, %v2477
    %v2594 = vpack.c.b16 %v2482, %v2478
    %v2595 = vpack.c.b16 %v2487, %v2483
    %v2596 = vpack.c.b16 %v2488, %v2484
    %v2597 = vpack.c.b16 %v2489, %v2485
    %v2598 = vpack.c.b16 %v2490, %v2486
    %v2599 = vpack.c.b16 %v2495, %v2491
    %v2600 = vpack.c.b16 %v2496, %v2492
    %v2601 = vpack.c.b16 %v2497, %v2493
    %v2602 = vpack.c.b16 %v2498, %v2494
    %v2603 = vpack.c.b16 %v2503, %v2499
    %v2604 = vpack.c.b16 %v2504, %v2500
    %v2605 = vpack.c.b16 %v2505, %v2501
    %v2606 = vpack.c.b16 %v2506, %v2502
    %v2607 = vpack.c.b16 %v2511, %v2507
    %v2608 = vpack.c.b16 %v2512, %v2508
    %v2609 = vpack.c.b16 %v2513, %v2509
    %v2610 = vpack.c.b16 %v2514, %v2510
    %v2611 = vpack.c.b16 %v2519, %v2515
    %v2612 = vpack.c.b16 %v2520, %v2516
    %v2613 = vpack.c.b16 %v2521, %v2517
    %v2614 = vpack.c.b16 %v2522, %v2518
    %v2615 = vpack.c.b16 %v2527, %v2523
    %v2616 = vpack.c.b16 %v2528, %v2524
    %v2617 = vpack.c.b16 %v2529, %v2525
    %v2618 = vpack.c.b16 %v2530, %v2526
    %v2619 = vpack.c.b16 %v2535, %v2531
    %v2620 = vpack.c.b16 %v2536, %v2532
    %v2621 = vpack.c.b16 %v2537, %v2533
    %v2622 = vpack.c.b16 %v2538, %v2534
    %v2623 = vpack.c.b16 %v2543, %v2539
    %v2624 = vpack.c.b16 %v2544, %v2540
    %v2625 = vpack.c.b16 %v2545, %v2541
    %v2626 = vpack.c.b16 %v2546, %v2542
    %v2627 = vpack.c.b16 %v2551, %v2547
    %v2628 = vpack.c.b16 %v2552, %v2548
    %v2629 = vpack.c.b16 %v2553, %v2549
    %v2630 = vpack.c.b16 %v2554, %v2550
    %v2631 = vpack.c.b16 %v2559, %v2555
    %v2632 = vpack.c.b16 %v2560, %v2556
    %v2633 = vpack.c.b16 %v2561, %v2557
    %v2634 = vpack.c.b16 %v2562, %v2558
    %v2635 = vpack.c.b16 %v2567, %v2563
    %v2636 = vpack.c.b16 %v2568, %v2564
    %v2637 = vpack.c.b16 %v2569, %v2565
    %v2638 = vpack.c.b16 %v2570, %v2566
    %v2639 = vpack.c.b16 %v2575, %v2571
    %v2640 = vpack.c.b16 %v2576, %v2572
    %v2641 = vpack.c.b16 %v2577, %v2573
    %v2642 = vpack.c.b16 %v2578, %v2574
    %2707 = vmatprep.subr.bf16.mxu0 %v2580
    %2708 = vmatpush1.bf16.msra.mxu0 %v2579
    %2709 = vmatprep.subr.bf16.mxu0 %v2584
    %2710 = vmatpush1.bf16.msra.mxu0 %v2583
    %2711 = vmatprep.subr.bf16.mxu0 %v2588
    %2712 = vmatpush1.bf16.msra.mxu0 %v2587
    %2713 = vmatprep.subr.bf16.mxu0 %v2592
    %2714 = vmatpush1.bf16.msra.mxu0 %v2591
    %2715 = vmatprep.subr.bf16.mxu0 %v2596
    %2716 = vmatpush1.bf16.msra.mxu0 %v2595
    %2717 = vmatprep.subr.bf16.mxu0 %v2600
    %2718 = vmatpush1.bf16.msra.mxu0 %v2599
    %2719 = vmatprep.subr.bf16.mxu0 %v2604
    %2720 = vmatpush1.bf16.msra.mxu0 %v2603
    %2721 = vmatprep.subr.bf16.mxu0 %v2608
    %2722 = vmatpush1.bf16.msra.mxu0 %v2607
    %2723 = vmatprep.subr.bf16.mxu0 %v2612
    %2724 = vmatpush1.bf16.msra.mxu0 %v2611
    %2725 = vmatprep.subr.bf16.mxu0 %v2616
    %2726 = vmatpush1.bf16.msra.mxu0 %v2615
    %2727 = vmatprep.subr.bf16.mxu0 %v2620
    %2728 = vmatpush1.bf16.msra.mxu0 %v2619
    %2729 = vmatprep.subr.bf16.mxu0 %v2624
    %2730 = vmatpush1.bf16.msra.mxu0 %v2623
    %2731 = vmatprep.subr.bf16.mxu0 %v2628
    %2732 = vmatpush1.bf16.msra.mxu0 %v2627
    %2733 = vmatprep.subr.bf16.mxu0 %v2632
    %2734 = vmatpush1.bf16.msra.mxu0 %v2631
    %2735 = vmatprep.subr.bf16.mxu0 %v2636
    %2736 = vmatpush1.bf16.msra.mxu0 %v2635
    %2737 = vmatprep.subr.bf16.mxu0 %v2640
    %2738 = vmatpush1.bf16.msra.mxu0 %v2639
    %2739 = vmatprep.mubr.bf16.mxu0 %v2386
    %2740 = vmatmul.mubr.bf16.gmra.mrb[0].mxu0 %v2385
    %v2741 = vpop.f32.mrb[0].mxu0
    %v2742 = vadd.f32 0.0, %v2741
    %v2743 = vpop.f32.mrb[0].mxu0
    %v2744 = vadd.f32 0.0, %v2743
    %v2745 = vpop.f32.mrb[0].mxu0
    %v2746 = vadd.f32 0.0, %v2745
    %v2747 = vpop.f32.mrb[0].mxu0
    %v2748 = vadd.f32 0.0, %v2747
    %2749 = vdwg.mxu0
    %2750 = vmatprep.subr.bf16.mxu0 %v2582
    %2751 = vmatpush1.bf16.msra.mxu0 %v2581
    %2752 = vmatprep.subr.bf16.mxu0 %v2586
    %2753 = vmatpush1.bf16.msra.mxu0 %v2585
    %2754 = vmatprep.subr.bf16.mxu0 %v2590
    %2755 = vmatpush1.bf16.msra.mxu0 %v2589
    %2756 = vmatprep.subr.bf16.mxu0 %v2594
    %2757 = vmatpush1.bf16.msra.mxu0 %v2593
    %2758 = vmatprep.subr.bf16.mxu0 %v2598
    %2759 = vmatpush1.bf16.msra.mxu0 %v2597
    %2760 = vmatprep.subr.bf16.mxu0 %v2602
    %2761 = vmatpush1.bf16.msra.mxu0 %v2601
    %2762 = vmatprep.subr.bf16.mxu0 %v2606
    %2763 = vmatpush1.bf16.msra.mxu0 %v2605
    %2764 = vmatprep.subr.bf16.mxu0 %v2610
    %2765 = vmatpush1.bf16.msra.mxu0 %v2609
    %2766 = vmatprep.subr.bf16.mxu0 %v2614
    %2767 = vmatpush1.bf16.msra.mxu0 %v2613
    %2768 = vmatprep.subr.bf16.mxu0 %v2618
    %2769 = vmatpush1.bf16.msra.mxu0 %v2617
    %2770 = vmatprep.subr.bf16.mxu0 %v2622
    %2771 = vmatpush1.bf16.msra.mxu0 %v2621
    %2772 = vmatprep.subr.bf16.mxu0 %v2626
    %2773 = vmatpush1.bf16.msra.mxu0 %v2625
    %2774 = vmatprep.subr.bf16.mxu0 %v2630
    %2775 = vmatpush1.bf16.msra.mxu0 %v2629
    %2776 = vmatprep.subr.bf16.mxu0 %v2634
    %2777 = vmatpush1.bf16.msra.mxu0 %v2633
    %2778 = vmatprep.subr.bf16.mxu0 %v2638
    %2779 = vmatpush1.bf16.msra.mxu0 %v2637
    %2780 = vmatprep.subr.bf16.mxu0 %v2642
    %2781 = vmatpush1.bf16.msra.mxu0 %v2641
    %2782 = vmatprep.mubr.bf16.mxu0 %v2386
    %2783 = vmatmul.mubr.bf16.gmra.mrb[0].mxu0 %v2385
    %v2784 = vpop.f32.mrb[0].mxu0
    %v2785 = vadd.f32 0.0, %v2784
    %v2786 = vpop.f32.mrb[0].mxu0
    %v2787 = vadd.f32 0.0, %v2786
    %v2788 = vpop.f32.mrb[0].mxu0
    %v2789 = vadd.f32 0.0, %v2788
    %v2790 = vpop.f32.mrb[0].mxu0
    %v2791 = vadd.f32 0.0, %v2790
    %2792 = vdwg.mxu0
    %v2793 = vld [vmem:[#allocation4 + $0xee0] sm:$0xf]
    %v2794 = vld [vmem:[#allocation4 + $0xef0] sm:$0xf]
    %v2795 = vld [vmem:[#allocation4 + $0xf00] sm:$0xf]
    %v2796 = vld [vmem:[#allocation4 + $0xf10] sm:$0xf]
    %v2797 = vld [vmem:[#allocation4 + $0xf20] sm:$0x1]
    %v2798 = vpack.c.bf16 %v2746, %v2742
    %v2799 = vpack.c.bf16 %v2748, %v2744
    %v2800 = vpack.c.bf16 %v2789, %v2785
    %v2801 = vpack.c.bf16 %v2791, %v2787
    %s2802 = scalar_lea.vmem [#allocation6], 4
    %v2803 = vld [vmem:[%s2802] ss:$8 sm:$0x3]
    %v2805 = vlaneseq
    %v2806 = vshrl.u32 %v2805, 7
    %v2807 = vsub.s32 0, %v2806
    %v2808 = vrot.slane %v2803, %v2807
    %v2809 = vlaneseq
    %v2810 = vshrl.u32 %v2809, 7
    %v2811 = vsub.s32 1, %v2810
    %v2812 = vrot.slane %v2803, %v2811
    %v2820 = vunpack.c.l.b16 %v2793
    %v2821 = vunpack.c.l.b16 %v2794
    %v2822 = vunpack.c.l.b16 %v2795
    %v2823 = vunpack.c.l.b16 %v2796
    %v2824 = vunpack.c.l.b16 %v2797
    %v2825 = vpack.c.b16 %v2821, %v2820
    %v2826 = vpack.c.b16 %v2823, %v2822
    %v2827 = vpack.c.b16 %v2824, %v2824
    %v2829 = vsel %vm192, %v2825, 0
    %v2832 = vsel %vm192, %v2826, 0
    %v2835 = vsel %vm192, %v2827, 0
    %2837 = vmatprep.subr.bf16.mxu0 %v2799
    %2838 = vmatpush1.bf16.msra.mxu0 %v2798
    %2839 = vmatprep.subr.bf16.mxu0 %v2801
    %2840 = vmatpush1.bf16.msra.mxu0 %v2800
    %2841 = vmatprep.subr.bf16.mxu0 0
    %2842 = vmatpush1.bf16.msra.mxu0 0
    %2843 = vmatprep.subr.bf16.mxu0 0
    %2844 = vmatpush1.bf16.msra.mxu0 0
    %2845 = vmatprep.subr.bf16.mxu0 0
    %2846 = vmatpush1.bf16.msra.mxu0 0
    %2847 = vmatprep.subr.bf16.mxu0 0
    %2848 = vmatpush1.bf16.msra.mxu0 0
    %2849 = vmatprep.subr.bf16.mxu0 0
    %2850 = vmatpush1.bf16.msra.mxu0 0
    %2851 = vmatprep.subr.bf16.mxu0 0
    %2852 = vmatpush1.bf16.msra.mxu0 0
    %2853 = vmatprep.subr.bf16.mxu0 0
    %2854 = vmatpush1.bf16.msra.mxu0 0
    %2855 = vmatprep.subr.bf16.mxu0 0
    %2856 = vmatpush1.bf16.msra.mxu0 0
    %2857 = vmatprep.subr.bf16.mxu0 0
    %2858 = vmatpush1.bf16.msra.mxu0 0
    %2859 = vmatprep.subr.bf16.mxu0 0
    %2860 = vmatpush1.bf16.msra.mxu0 0
    %2861 = vmatprep.subr.bf16.mxu0 0
    %2862 = vmatpush1.bf16.msra.mxu0 0
    %2863 = vmatprep.subr.bf16.mxu0 0
    %2864 = vmatpush1.bf16.msra.mxu0 0
    %2865 = vmatprep.subr.bf16.mxu0 0
    %2866 = vmatpush1.bf16.msra.mxu0 0
    %2867 = vmatprep.subr.bf16.mxu0 0
    %2868 = vmatpush1.bf16.msra.mxu0 0
    %2869 = vmatprep.mubr.bf16.mxu0 0
    %2870 = vmatmul.mubr.bf16.gmra.mrb[0].mxu0 %v2829
    %v2871 = vpop.f32.mrb[0].mxu0
    %v2872 = vadd.f32 %v2808, %v2871
    %v2873 = vpop.f32.mrb[0].mxu0
    %v2874 = vadd.f32 %v2812, %v2873
    %v2875 = vpop.f32.mrb[0].mxu0
    %v2876 = vadd.f32 %v2808, %v2875
    %v2877 = vpop.f32.mrb[0].mxu0
    %v2878 = vadd.f32 %v2812, %v2877
    %2879 = vmatprep.mubr.bf16.mxu0 0
    %2880 = vmatmul.mubr.bf16.gmra.mrb[0].mxu0 %v2832
    %v2881 = vpop.f32.mrb[0].mxu0
    %v2882 = vadd.f32 %v2808, %v2881
    %v2883 = vpop.f32.mrb[0].mxu0
    %v2884 = vadd.f32 %v2812, %v2883
    %v2885 = vpop.f32.mrb[0].mxu0
    %v2886 = vadd.f32 %v2808, %v2885
    %v2887 = vpop.f32.mrb[0].mxu0
    %v2888 = vadd.f32 %v2812, %v2887
    %2889 = vmatprep.mubr.bf16.mxu0 0
    %2890 = vmatmul.mubr.bf16.gmra.mrb[0].mxu0 %v2835
    %v2891 = vpop.f32.mrb[0].mxu0
    %v2892 = vadd.f32 %v2808, %v2891
    %v2893 = vpop.f32.mrb[0].mxu0
    %v2894 = vadd.f32 %v2812, %v2893
    %v2895 = vpop.f32.mrb[0].mxu0
    %v2896 = vpop.f32.mrb[0].mxu0
    %2897 = vdwg.mxu0
    %v2898 = vmax.f32 %v2872, 0.0
    %v2899 = vmax.f32 %v2874, 0.0
    %v2900 = vmax.f32 %v2876, 0.0
    %v2901 = vmax.f32 %v2878, 0.0
    %v2902 = vmax.f32 %v2882, 0.0
    %v2903 = vmax.f32 %v2884, 0.0
    %v2904 = vmax.f32 %v2886, 0.0
    %v2905 = vmax.f32 %v2888, 0.0
    %v2906 = vmax.f32 %v2892, 0.0
    %v2907 = vmax.f32 %v2894, 0.0
    %v2908 = vld [vmem:[#allocation4 + $0xf40] sm:$0xf]
    %v2909 = vld [vmem:[#allocation4 + $0xf50] sm:$0xf]
    %v2910 = vld [vmem:[#allocation4 + $0xf60] sm:$0xf]
    %v2911 = vld [vmem:[#allocation4 + $0xf70] sm:$0xf]
    %v2912 = vld [vmem:[#allocation4 + $0xf80] sm:$0xf]
    %v2913 = vld [vmem:[#allocation4 + $0xf90] sm:$0xf]
    %v2914 = vld [vmem:[#allocation4 + $0xfa0] sm:$0xf]
    %v2915 = vld [vmem:[#allocation4 + $0xfb0] sm:$0xf]
    %v2916 = vld [vmem:[#allocation4 + $0xfc0] sm:$0xf]
    %v2917 = vld [vmem:[#allocation4 + $0xfd0] sm:$0xf]
    %v2918 = vld [vmem:[#allocation4 + $0xfe0] sm:$0xf]
    %v2919 = vld [vmem:[#allocation4 + $0xff0] sm:$0xf]
    %v2920 = vld [vmem:[#allocation4 + $0x1000] sm:$0xf]
    %v2921 = vld [vmem:[#allocation4 + $0x1010] sm:$0xf]
    %v2922 = vld [vmem:[#allocation4 + $0x1020] sm:$0xf]
    %v2923 = vld [vmem:[#allocation4 + $0x1030] sm:$0xf]
    %v2924 = vld [vmem:[#allocation4 + $0x1040] sm:$0xf]
    %v2925 = vld [vmem:[#allocation4 + $0x1050] sm:$0xf]
    %v2926 = vld [vmem:[#allocation4 + $0x1060] sm:$0xf]
    %v2927 = vld [vmem:[#allocation4 + $0x1070] sm:$0xf]
    %v2928 = vld [vmem:[#allocation4 + $0x1080] sm:$0xf]
    %v2929 = vld [vmem:[#allocation4 + $0x1090] sm:$0xf]
    %v2930 = vld [vmem:[#allocation4 + $0x10a0] sm:$0xf]
    %v2931 = vld [vmem:[#allocation4 + $0x10b0] sm:$0xf]
    %v2932 = vld [vmem:[#allocation4 + $0x10c0] sm:$0xf]
    %v2933 = vld [vmem:[#allocation4 + $0x10d0] sm:$0xf]
    %v2934 = vld [vmem:[#allocation4 + $0x10e0] sm:$0xf]
    %v2935 = vld [vmem:[#allocation4 + $0x10f0] sm:$0xf]
    %v2936 = vld [vmem:[#allocation4 + $0x1100] sm:$0xf]
    %v2937 = vld [vmem:[#allocation4 + $0x1110] sm:$0xf]
    %v2938 = vld [vmem:[#allocation4 + $0x1120] sm:$0xf]
    %v2939 = vld [vmem:[#allocation4 + $0x1130] sm:$0xf]
    %v2940 = vpack.c.bf16 %v2900, %v2898
    %v2941 = vpack.c.bf16 %v2901, %v2899
    %v2942 = vpack.c.bf16 %v2904, %v2902
    %v2943 = vpack.c.bf16 %v2905, %v2903
    %v2944 = vpack.c.bf16 %v2906, %v2906
    %v2945 = vpack.c.bf16 %v2907, %v2907
    %v2946 = vld [vmem:[#allocation6 + $0x5] ss:$0 sm:$0xff]
    %v2979 = vunpack.c.l.b16 %v2908
    %v2980 = vunpack.c.l.b16 %v2909
    %v2981 = vunpack.c.l.b16 %v2910
    %v2982 = vunpack.c.l.b16 %v2911
    %v2983 = vunpack.c.l.b16 %v2912
    %v2984 = vunpack.c.l.b16 %v2913
    %v2985 = vunpack.c.l.b16 %v2914
    %v2986 = vunpack.c.l.b16 %v2915
    %v2987 = vunpack.c.l.b16 %v2916
    %v2988 = vunpack.c.l.b16 %v2917
    %v2989 = vunpack.c.l.b16 %v2918
    %v2990 = vunpack.c.l.b16 %v2919
    %v2991 = vunpack.c.l.b16 %v2920
    %v2992 = vunpack.c.l.b16 %v2921
    %v2993 = vunpack.c.l.b16 %v2922
    %v2994 = vunpack.c.l.b16 %v2923
    %v2995 = vunpack.c.l.b16 %v2924
    %v2996 = vunpack.c.l.b16 %v2925
    %v2997 = vunpack.c.l.b16 %v2926
    %v2998 = vunpack.c.l.b16 %v2927
    %v2999 = vunpack.c.l.b16 %v2928
    %v3000 = vunpack.c.l.b16 %v2929
    %v3001 = vunpack.c.l.b16 %v2930
    %v3002 = vunpack.c.l.b16 %v2931
    %v3003 = vunpack.c.l.b16 %v2932
    %v3004 = vunpack.c.l.b16 %v2933
    %v3005 = vunpack.c.l.b16 %v2934
    %v3006 = vunpack.c.l.b16 %v2935
    %v3007 = vunpack.c.l.b16 %v2936
    %v3008 = vunpack.c.l.b16 %v2937
    %v3009 = vunpack.c.l.b16 %v2938
    %v3010 = vunpack.c.l.b16 %v2939
    %v3011 = vpack.c.b16 %v2980, %v2979
    %v3012 = vpack.c.b16 %v2982, %v2981
    %v3013 = vpack.c.b16 %v2984, %v2983
    %v3014 = vpack.c.b16 %v2986, %v2985
    %v3015 = vpack.c.b16 %v2988, %v2987
    %v3016 = vpack.c.b16 %v2990, %v2989
    %v3017 = vpack.c.b16 %v2992, %v2991
    %v3018 = vpack.c.b16 %v2994, %v2993
    %v3019 = vpack.c.b16 %v2996, %v2995
    %v3020 = vpack.c.b16 %v2998, %v2997
    %v3021 = vpack.c.b16 %v3000, %v2999
    %v3022 = vpack.c.b16 %v3002, %v3001
    %v3023 = vpack.c.b16 %v3004, %v3003
    %v3024 = vpack.c.b16 %v3006, %v3005
    %v3025 = vpack.c.b16 %v3008, %v3007
    %v3026 = vpack.c.b16 %v3010, %v3009
    %3043 = vmatprep.subr.bf16.mxu0 0
    %3044 = vmatpush1.bf16.msra.mxu0 %v3011
    %3045 = vmatprep.subr.bf16.mxu0 0
    %3046 = vmatpush1.bf16.msra.mxu0 %v3012
    %3047 = vmatprep.subr.bf16.mxu0 0
    %3048 = vmatpush1.bf16.msra.mxu0 %v3013
    %3049 = vmatprep.subr.bf16.mxu0 0
    %3050 = vmatpush1.bf16.msra.mxu0 %v3014
    %3051 = vmatprep.subr.bf16.mxu0 0
    %3052 = vmatpush1.bf16.msra.mxu0 %v3015
    %3053 = vmatprep.subr.bf16.mxu0 0
    %3054 = vmatpush1.bf16.msra.mxu0 %v3016
    %3055 = vmatprep.subr.bf16.mxu0 0
    %3056 = vmatpush1.bf16.msra.mxu0 %v3017
    %3057 = vmatprep.subr.bf16.mxu0 0
    %3058 = vmatpush1.bf16.msra.mxu0 %v3018
    %3059 = vmatprep.subr.bf16.mxu0 0
    %3060 = vmatpush1.bf16.msra.mxu0 %v3019
    %3061 = vmatprep.subr.bf16.mxu0 0
    %3062 = vmatpush1.bf16.msra.mxu0 %v3020
    %3063 = vmatprep.subr.bf16.mxu0 0
    %3064 = vmatpush1.bf16.msra.mxu0 %v3021
    %3065 = vmatprep.subr.bf16.mxu0 0
    %3066 = vmatpush1.bf16.msra.mxu0 %v3022
    %3067 = vmatprep.subr.bf16.mxu0 0
    %3068 = vmatpush1.bf16.msra.mxu0 %v3023
    %3069 = vmatprep.subr.bf16.mxu0 0
    %3070 = vmatpush1.bf16.msra.mxu0 %v3024
    %3071 = vmatprep.subr.bf16.mxu0 0
    %3072 = vmatpush1.bf16.msra.mxu0 %v3025
    %3073 = vmatprep.subr.bf16.mxu0 0
    %3074 = vmatpush1.bf16.msra.mxu0 %v3026
    %3075 = vmatprep.mubr.bf16.mxu0 %v2941
    %3076 = vmatmul.mubr.bf16.gmra.mrb[0].mxu0 %v2940
    %v3077 = vpop.f32.mrb[0].mxu0
    %v3078 = vadd.f32 %v2946, %v3077
    %v3079 = vpop.f32.mrb[0].mxu0
    %v3080 = vpop.f32.mrb[0].mxu0
    %v3081 = vadd.f32 %v2946, %v3080
    %v3082 = vpop.f32.mrb[0].mxu0
    %3083 = vmatprep.mubr.bf16.mxu0 %v2943
    %3084 = vmatmul.mubr.bf16.gmra.mrb[0].mxu0 %v2942
    %v3085 = vpop.f32.mrb[0].mxu0
    %v3086 = vadd.f32 %v2946, %v3085
    %v3087 = vpop.f32.mrb[0].mxu0
    %v3088 = vpop.f32.mrb[0].mxu0
    %v3089 = vadd.f32 %v2946, %v3088
    %v3090 = vpop.f32.mrb[0].mxu0
    %3091 = vmatprep.mubr.bf16.mxu0 %v2945
    %3092 = vmatmul.mubr.bf16.gmra.mrb[0].mxu0 %v2944
    %v3093 = vpop.f32.mrb[0].mxu0
    %v3094 = vadd.f32 %v2946, %v3093
    %v3095 = vpop.f32.mrb[0].mxu0
    %v3096 = vpop.f32.mrb[0].mxu0
    %v3097 = vpop.f32.mrb[0].mxu0
    %3098 = vdwg.mxu0
    %v3099 = vsub.f32 0.0, %v3078
    %v3100 = vsub.f32 0.0, %v3081
    %v3101 = vsub.f32 0.0, %v3086
    %v3102 = vsub.f32 0.0, %v3089
    %v3103 = vsub.f32 0.0, %v3094
    %v3104 = vmul.f32 %v3099, 1.442695
    %v3105 = vpow.pop %v3104
    %v3106 = vmul.f32 %v3100, 1.442695
    %v3107 = vpow.pop %v3106
    %v3108 = vmul.f32 %v3101, 1.442695
    %v3109 = vpow.pop %v3108
    %v3110 = vmul.f32 %v3102, 1.442695
    %v3111 = vpow.pop %v3110
    %v3112 = vmul.f32 %v3103, 1.442695
    %v3113 = vpow.pop %v3112
    %v3114 = vadd.f32 %v3105, 1.0
    %v3115 = vadd.f32 %v3107, 1.0
    %v3116 = vadd.f32 %v3109, 1.0
    %v3117 = vadd.f32 %v3111, 1.0
    %v3118 = vadd.f32 %v3113, 1.0
    %v3119 = vrcp.pop %v3114
    %v3120 = vmul.f32 1.0, %v3119
    %v3121 = vrcp.pop %v3115
    %v3122 = vmul.f32 1.0, %v3121
    %v3123 = vrcp.pop %v3116
    %v3124 = vmul.f32 1.0, %v3123
    %v3125 = vrcp.pop %v3117
    %v3126 = vmul.f32 1.0, %v3125
    %v3127 = vrcp.pop %v3118
    %v3128 = vmul.f32 1.0, %v3127
    %3129 = vst [vmem:[%s3] sm:$0xff] %v3120
    %3130 = vst [vmem:[%s3 + $0x8] sm:$0xff] %v3122
    %3131 = vst [vmem:[%s3 + $0x10] sm:$0xff] %v3124
    %3132 = vst [vmem:[%s3 + $0x18] sm:$0xff] %v3126
    %3133 = vst [vmem:[%s3 + $0x20] sm:$0x3] %v3128
    // Predicated region
    $region26: #{unet_forward.1} parent=1 // pred_check
      _
    $region27: #{unet_forward.1} parent=1 // pred_check_branch
      %3135 = sbr.rel (0) target = $region29
    $region28: #{unet_forward.1} parent=1 // pred_region
      _
    $region29: #{unet_forward.1} parent=1 // pred_fallthru
      _
    // Predicated region
    $region30: #{unet_forward.1} parent=1 // pred_check
      _
    $region31: #{unet_forward.1} parent=1 // pred_check_branch
      %3137 = sbr.rel (0) target = $region33
    $region32: #{unet_forward.1} parent=1 // pred_region
      _
    $region33: #{unet_forward.1} parent=1 // pred_fallthru
      _
    %3138 = vsyncpa [#allocation3], 1
    %3139 = vsyncpa [#allocation5], 1

</llo_original>
